<compile_context>
chip_gen: v7x
topology: tpu7x:2x2x1
jax: 0.10.0
libtpu: 0.0.40
codegen_flags: <defaults>
</compile_context>

<pallas_src>
import functools

import jax
import jax.numpy as jnp
from jax.experimental import pallas as pl
from jax.experimental.pallas import tpu as pltpu


def _round_up(x, m):
    return (x + m - 1) // m * m


def _pick_t_chunk(tt, ts, A, itemsize, budget_bytes=512 * 1024):
    """Largest multiple-of-8 divisor of tt whose (tc, ts, A) temp fits the budget."""
    cap = max(8, budget_bytes // max(1, ts * A * itemsize))
    for cand in (128, 64, 32, 16, 8):
        if cand <= cap and tt % cand == 0:
            return cand
    return 8


def _bahdanau_tile_kernel(enc_ref, dec_ref, va_ref, out_ref, *, tc):
    """enc_ref: (1, ts, A)  dec_ref: (1, tt, A)  va_ref: (1, A)  out_ref: (1, tt, ts)."""
    tt = dec_ref.shape[1]
    num_chunks = tt // tc
    va = va_ref[0].astype(jnp.float32)                       # (A,)

    def t_chunk(c, carry):
        t0 = pl.multiple_of(c * tc, tc)
        d = dec_ref[0, pl.ds(t0, tc), :]                     # (tc, A) compute dtype
        e = enc_ref[0]                                       # (ts, A) compute dtype
        # (tc, ts, A) broadcast-sum + tanh: the EUP-bound piece.
        x = jnp.tanh(d[:, None, :] + e[None, :, :])
        # Weighted reduction over A, accumulated in f32 (hides under the tanh).
        s = jnp.sum(x.astype(jnp.float32) * va, axis=-1)     # (tc, ts)
        out_ref[0, pl.ds(t0, tc), :] = s
        return carry

    jax.lax.fori_loop(0, num_chunks, t_chunk, 0,
                      unroll=bool(num_chunks <= 8))


def bahdanau_scores(dec_out, enc_outs, W_s, W_t, b_t, v_a, *,
                    compute_dtype=jnp.float32, tt_max=128, ts_max=256):
    """dec_out: (T, B, H), enc_outs: (S, B, H) -> scores (T, B, S) (PyTorch layout).

    ts_max=256 keeps the double-buffered tiles comfortably inside v7x's 64 MiB
    VMEM; on v5e/v6e (128 MiB) ts_max=512 is a good setting.
    """
    T, B, H = dec_out.shape
    S = enc_outs.shape[0]
    A = W_s.shape[0]
    cd = jnp.dtype(compute_dtype)

    # ---- Hoisted projections (negligible vs the T*S*A tanh).  The einsums emit
    # the batch-major layouts directly, so no separate transpose of the inputs.
    enc_att = jnp.einsum('sbh,ah->bsa', enc_outs.astype(cd), W_s.astype(cd),
                         preferred_element_type=jnp.float32)            # (B, S, A)
    dec_att = jnp.einsum('tbh,ah->bta', dec_out.astype(cd), W_t.astype(cd),
                         preferred_element_type=jnp.float32)
    dec_att = dec_att + b_t.astype(jnp.float32)                         # (B, T, A)
    enc_att = enc_att.astype(cd)
    dec_att = dec_att.astype(cd)
    va_row = jnp.asarray(v_a, jnp.float32).reshape(1, A)

    # ---- Tile sizes: lane-dense S tiles (multiple of 128), 8-aligned T tiles.
    tt = min(tt_max, _round_up(T, 8))
    ts = min(ts_max, _round_up(S, 128))
    T_pad = _round_up(T, tt)
    S_pad = _round_up(S, ts)
    enc_att = jnp.pad(enc_att, ((0, 0), (0, S_pad - S), (0, 0)))
    dec_att = jnp.pad(dec_att, ((0, 0), (0, T_pad - T), (0, 0)))

    tc = _pick_t_chunk(tt, ts, A, cd.itemsize)
    kernel = functools.partial(_bahdanau_tile_kernel, tc=tc)

    out = pl.pallas_call(
        kernel,
        out_shape=jax.ShapeDtypeStruct((B, T_pad, S_pad), jnp.float32),
        grid=(B, T_pad // tt, S_pad // ts),
        in_specs=[
            pl.BlockSpec((1, ts, A), lambda b, ti, si: (b, si, 0)),
            pl.BlockSpec((1, tt, A), lambda b, ti, si: (b, ti, 0)),
            pl.BlockSpec((1, A), lambda b, ti, si: (0, 0)),
        ],
        out_specs=pl.BlockSpec((1, tt, ts), lambda b, ti, si: (b, ti, si)),
        compiler_params=pltpu.CompilerParams(
            # Every grid point writes a distinct output tile -> all parallel
            # (lets v7x shard the grid across both TensorCores).
            dimension_semantics=("parallel", "parallel", "parallel"),
            vmem_limit_bytes=32 * 1024 * 1024),
    )(enc_att, dec_att, va_row)

    # Back to PyTorch layout (T, B, S).  The problem is EUP-bound, so this single
    # output relayout is minor; input-side transposes were already folded into
    # the projection einsums above.
    return jnp.transpose(out[:, :T, :S], (1, 0, 2))


def reference(dec_out, enc_outs, W_s, W_t, b_t, v_a):
    """Pure-JAX mirror of the PyTorch forward pass (f32)."""
    enc_att = jnp.einsum('sbh,ah->sba', enc_outs, W_s)              # (S, B, A)
    dec_att = jnp.einsum('tbh,ah->tba', dec_out, W_t) + b_t         # (T, B, A)
    x = jnp.tanh(enc_att[:, None] + dec_att[None])                  # (S, T, B, A)
    scores = jnp.einsum('stba,a->stb', x, v_a[:, 0])                # (S, T, B)
    return jnp.transpose(scores, (1, 2, 0))                         # (T, B, S)


if __name__ == "__main__":
    # Small shapes consistent with the module's forward.
    src_len, trg_len, batch, hid_dim, att_dim = 16, 8, 2, 32, 32

    key = jax.random.PRNGKey(0)
    k = jax.random.split(key, 6)
    enc_outs = jax.random.normal(k[0], (src_len, batch, hid_dim), jnp.float32)
    dec_out = jax.random.normal(k[1], (trg_len, batch, hid_dim), jnp.float32)

    # Deterministic parameter init (shapes from __init__):
    #   W_s: Linear(hid, att, bias=False) -> weight (att, hid)
    #   W_t: Linear(hid, att, bias=True)  -> weight (att, hid), bias (att,)
    #   v_a: Parameter (att, 1), uniform(-0.05, 0.05)
    W_s = jax.random.uniform(k[2], (att_dim, hid_dim), jnp.float32, -0.1, 0.1)
    W_t = jax.random.uniform(k[3], (att_dim, hid_dim), jnp.float32, -0.1, 0.1)
    b_t = jax.random.uniform(k[4], (att_dim,), jnp.float32, -0.1, 0.1)
    v_a = jax.random.uniform(k[5], (att_dim, 1), jnp.float32, -0.05, 0.05)

    ref = reference(dec_out, enc_outs, W_s, W_t, b_t, v_a)

    # f32 path (strict accuracy; also the right setting for v5e).
    out_f32 = jax.block_until_ready(
        bahdanau_scores(dec_out, enc_outs, W_s, W_t, b_t, v_a,
                        compute_dtype=jnp.float32))
    assert out_f32.shape == (trg_len, batch, src_len), out_f32.shape
    assert out_f32.dtype == jnp.float32
    assert jnp.allclose(out_f32, ref, atol=1e-5, rtol=1e-5), \
        float(jnp.max(jnp.abs(out_f32 - ref)))

    # bf16 streaming/tanh path (fast path on v6e/v7x; f32 accumulation).
    out_bf16 = jax.block_until_ready(
        bahdanau_scores(dec_out, enc_outs, W_s, W_t, b_t, v_a,
                        compute_dtype=jnp.bfloat16))
    assert out_bf16.shape == (trg_len, batch, src_len), out_bf16.shape
    assert jnp.allclose(out_bf16, ref, atol=2e-2, rtol=2e-2), \
        float(jnp.max(jnp.abs(out_bf16 - ref)))

    print("KERNEL_OK")
</pallas_src>

<mosaic_0001>
module attributes {stable_mosaic.version = 11 : i64} {
  func.func @_bahdanau_tile_kernel(%arg0: i32, %arg1: i32, %arg2: i32, %arg3: memref<1x128x32xf32, #tpu.memory_space<vmem>>, %arg4: memref<1x8x32xf32, #tpu.memory_space<vmem>>, %arg5: memref<1x32xf32, #tpu.memory_space<vmem>>, %arg6: memref<1x8x128xf32, #tpu.memory_space<vmem>>) attributes {dimension_semantics = [#tpu.dimension_semantics<parallel>, #tpu.dimension_semantics<parallel>, #tpu.dimension_semantics<parallel>], iteration_bounds = array<i64: 2, 1, 1>, scalar_prefetch = 0 : i64, scratch_operands = 0 : i64, tpu.core_type = #tpu.core_type<tc>, window_params = [{transform_indices = @transform_0, window_bounds = array<i64: 1, 128, 32>}, {transform_indices = @transform_1, window_bounds = array<i64: 1, 8, 32>}, {pipeline_mode = #tpu.pipeline_mode<synchronous>, transform_indices = @transform_2, window_bounds = array<i64: 1, 32>}, {transform_indices = @transform_3, window_bounds = array<i64: 1, 8, 128>}]} {
    %c0 = arith.constant 0 : index
    %c0_0 = arith.constant 0 : index
    %0 = vector.load %arg5[%c0, %c0_0] : memref<1x32xf32, #tpu.memory_space<vmem>>, vector<1x32xf32>
    %1 = vector.shape_cast %0 : vector<1x32xf32> to vector<32xf32>
    %c0_i32 = arith.constant 0 : i32
    %c8_i32 = arith.constant 8 : i32
    %2 = arith.muli %c0_i32, %c8_i32 : i32
    %3 = tpu.assume_multiple %2, 8 : i32
    %c0_1 = arith.constant 0 : index
    %4 = arith.index_cast %3 : i32 to index
    %c0_2 = arith.constant 0 : index
    %5 = vector.load %arg4[%c0_1, %4, %c0_2] : memref<1x8x32xf32, #tpu.memory_space<vmem>>, vector<1x8x32xf32>
    %6 = vector.shape_cast %5 : vector<1x8x32xf32> to vector<8x32xf32>
    %c0_3 = arith.constant 0 : index
    %c0_4 = arith.constant 0 : index
    %c0_5 = arith.constant 0 : index
    %7 = vector.load %arg3[%c0_3, %c0_4, %c0_5] : memref<1x128x32xf32, #tpu.memory_space<vmem>>, vector<1x128x32xf32>
    %8 = vector.shape_cast %7 : vector<1x128x32xf32> to vector<128x32xf32>
    %9 = vector.shape_cast %6 : vector<8x32xf32> to vector<8x1x32xf32>
    %10 = vector.shape_cast %8 : vector<128x32xf32> to vector<1x128x32xf32>
    %11 = vector.broadcast %9 : vector<8x1x32xf32> to vector<8x128x32xf32>
    %12 = vector.broadcast %10 : vector<1x128x32xf32> to vector<8x128x32xf32>
    %13 = arith.addf %11, %12 : vector<8x128x32xf32>
    %14 = math.tanh %13 : vector<8x128x32xf32>
    %15 = vector.shape_cast %1 : vector<32xf32> to vector<1x1x32xf32>
    %16 = vector.broadcast %15 : vector<1x1x32xf32> to vector<8x128x32xf32>
    %17 = arith.mulf %14, %16 : vector<8x128x32xf32>
    %cst = arith.constant dense<0.000000e+00> : vector<8x128xf32>
    %18 = vector.multi_reduction <add>, %17, %cst [2] : vector<8x128x32xf32> to vector<8x128xf32>
    %c0_6 = arith.constant 0 : index
    %19 = arith.index_cast %3 : i32 to index
    %c0_7 = arith.constant 0 : index
    %20 = vector.load %arg6[%c0_6, %19, %c0_7] : memref<1x8x128xf32, #tpu.memory_space<vmem>>, vector<1x8x128xf32>
    %21 = vector.shape_cast %20 : vector<1x8x128xf32> to vector<8x128xf32>
    %22 = vector.shape_cast %18 : vector<8x128xf32> to vector<1x8x128xf32>
    tpu.vector_store %arg6[%c0_6, %19, %c0_7], %22 {strides = array<i32>} : memref<1x8x128xf32, #tpu.memory_space<vmem>>, vector<1x8x128xf32>,
    %c1_i32 = arith.constant 1 : i32
    return
  }
  func.func @transform_0(%arg0: i32, %arg1: i32, %arg2: i32) -> (i32, i32, i32) {
    %c0_i32 = arith.constant 0 : i32
    %c0_i32_0 = arith.constant 0 : i32
    return %arg0, %arg2, %c0_i32 : i32, i32, i32
  }
  func.func @transform_1(%arg0: i32, %arg1: i32, %arg2: i32) -> (i32, i32, i32) {
    %c0_i32 = arith.constant 0 : i32
    %c0_i32_0 = arith.constant 0 : i32
    return %arg0, %arg1, %c0_i32 : i32, i32, i32
  }
  func.func @transform_2(%arg0: i32, %arg1: i32, %arg2: i32) -> (i32, i32) {
    %c0_i32 = arith.constant 0 : i32
    %c0_i32_0 = arith.constant 0 : i32
    %c0_i32_1 = arith.constant 0 : i32
    return %c0_i32, %c0_i32_0 : i32, i32
  }
  func.func @transform_3(%arg0: i32, %arg1: i32, %arg2: i32) -> (i32, i32, i32) {
    %c0_i32 = arith.constant 0 : i32
    return %arg0, %arg1, %arg2 : i32, i32, i32
  }
}

</mosaic_0001>

<llo_original>
// kernel: tpu_custom_call.1
$region0: #{tpu_custom_call.1}
  #allocation0 [shape = 'u32[]', space=smem, size = 0x4, offset = 0x4, fixed_abs, tag = 'smem constant byte address 0x4 - core index']
  #allocation1 [shape = 'u32[144,128]{1,0:T(1,128)}', space=vmem, size = 0x12000, scoped, tag = 'internal scratch']
  %s0 = inlined_call_operand.vmem [shape: f32[2,128,32], index: 0, kind: input, shape index: {}]
  %s1 = inlined_call_operand.vmem [shape: f32[2,8,32], index: 1, kind: input, shape index: {}]
  %s2 = inlined_call_operand.vmem [shape: f32[1,32], index: 2, kind: input, shape index: {}]
  %s3 = inlined_call_operand.hbm [shape: f32[2,8,128], index: 3, kind: output, shape index: {}]
  %s4 = sld [smem:[#allocation0]]
  $region45: #{tpu_custom_call.1} parent=0
    _
  %s6 = ssub.s32 1, %s4
  %s7 = scalar_select 0, %s6, %s4
  $region1: #{tpu_custom_call.1} parent=0
    #allocation2 [shape = 'u8[8192]{0}', space=vmem, size = 0x2000, scoped, tag = 'output window, operand 0']
    #allocation3 [shape = 's32[2]{0}', space=sflag, size = 0x8, scoped, tag = 'scoped memory for tpu_custom_call.1']
    %8 = vsyncpa [#allocation3], 0
    %s9 = scalar_lea.sflag [#allocation3], 1
    %10 = vsyncpa %s9, 0
    loop: start=0, step=1, limit=4
    $region2: #{tpu_custom_call.1} parent=1 // loop_pre_header
      _
    $region3: #{tpu_custom_call.1} parent=1 // loop_header
      %s12 = sphi 0, %s16
      %p13 = scmp.ge.s32.totalorder %s12, 4
      %s19 = sphi 0, %s38
      %s20 = sphi 0, %s34
      %s21 = sphi 0, %s30
      %s22 = sphi 0, %s19
      %s23 = sphi 0, %s20
      %s24 = sphi 0, %s21
      %s25 = sphi 0, %s22
      %s26 = sphi 0, %s23
      %s27 = sphi 0, %s24
      %s43 = sphi 0, %s45
      %s46 = sphi 0, %s43
      %s47 = sphi 0, %s46
      %s63 = sphi 0, %s47
      %s71 = sphi 0, %s73
      %s74 = sphi 0, %s71
      %s75 = sphi 0, %s74
      %s91 = sphi 0, %s75
      %s95 = sphi 0, %s95
      %s97 = sphi 0, %s95
      %s98 = sphi 0, %s97
      %s112 = sphi 0, %s98
      %s122 = sphi 0, %s124
      %s125 = sphi 0, %s122
      %s126 = sphi 0, %s125
      %s142 = sphi 0, %s126
    $region4: #{tpu_custom_call.1} parent=1 // loop_header_branch
      %15 = sbr.rel (%p13) target = $region8
    $region5: #{tpu_custom_call.1} parent=1 // loop_body
      %s17 = ssub.s32 %s12, 1
      %s18 = ssub.s32 %s12, 2
      %s28 = sadd.s32 1, %s21
      %p29 = scmp.ge.s32.totalorder %s28, 1
      %s30 = scalar_select %p29, 0, %s28
      %s31 = sadd.s32 1, %s20
      %s32 = scalar_select %p29, %s31, %s20
      %p33 = scmp.ge.s32.totalorder %s32, 1
      %s34 = scalar_select %p33, 0, %s32
      %s35 = sadd.s32 1, %s19
      %s36 = scalar_select %p33, %s35, %s19
      %p37 = scmp.ge.s32.totalorder %s36, 2
      %s38 = scalar_select %p37, 0, %s36
      %s39 = ssub.s32 %s19, %s38
      %s40 = ssub.s32 %s21, %s30
      %s41 = sor.u32 %s39, %s40
      %p42 = scmp.eq.s32.totalorder %s41, 0
      %s44 = sadd.s32 %s43, 1
      %s45 = scalar_select %p42, %s43, %s44
      %p48 = pneg %p42
      %p49 = scmp.eq.s32.totalorder %s12, 1
      %p50 = por %p48, %p49
      %p51 = scmp.ne.s32.totalorder %s43, %s46
      %p52 = scmp.eq.s32.totalorder %s12, 0
      %p53 = por %p51, %p52
      %p54 = scmp.ne.s32.totalorder %s43, %s46
      %p55 = scmp.eq.s32.totalorder %s17, 1
      %p56 = por %p54, %p55
      %p57 = scmp.ne.s32.totalorder %s46, %s47
      %p58 = scmp.eq.s32.totalorder %s17, 0
      %p59 = por %p57, %p58
      %p60 = scmp.ne.s32.totalorder %s46, %s47
      %p61 = scmp.eq.s32.totalorder %s18, 1
      %p62 = por %p60, %p61
      %p64 = scmp.ne.s32.totalorder %s47, %s63
      %p65 = scmp.eq.s32.totalorder %s18, 0
      %p66 = por %p64, %p65
      %s67 = ssub.s32 %s19, %s38
      %s68 = ssub.s32 %s20, %s34
      %s69 = sor.u32 %s67, %s68
      %p70 = scmp.eq.s32.totalorder %s69, 0
      %s72 = sadd.s32 %s71, 1
      %s73 = scalar_select %p70, %s71, %s72
      %p76 = pneg %p70
      %p77 = scmp.eq.s32.totalorder %s12, 1
      %p78 = por %p76, %p77
      %p79 = scmp.ne.s32.totalorder %s71, %s74
      %p80 = scmp.eq.s32.totalorder %s12, 0
      %p81 = por %p79, %p80
      %p82 = scmp.ne.s32.totalorder %s71, %s74
      %p83 = scmp.eq.s32.totalorder %s17, 1
      %p84 = por %p82, %p83
      %p85 = scmp.ne.s32.totalorder %s74, %s75
      %p86 = scmp.eq.s32.totalorder %s17, 0
      %p87 = por %p85, %p86
      %p88 = scmp.ne.s32.totalorder %s74, %s75
      %p89 = scmp.eq.s32.totalorder %s18, 1
      %p90 = por %p88, %p89
      %p92 = scmp.ne.s32.totalorder %s75, %s91
      %p93 = scmp.eq.s32.totalorder %s18, 0
      %p94 = por %p92, %p93
      %s96 = sadd.s32 %s95, 1
      %p99 = scmp.eq.s32.totalorder %s12, 1
      %p100 = scmp.ne.s32.totalorder %s95, %s97
      %p101 = scmp.eq.s32.totalorder %s12, 0
      %p102 = por %p100, %p101
      %p103 = scmp.ne.s32.totalorder %s95, %s97
      %p104 = scmp.eq.s32.totalorder %s17, 1
      %p105 = por %p103, %p104
      %p106 = scmp.ne.s32.totalorder %s97, %s98
      %p107 = scmp.eq.s32.totalorder %s17, 0
      %p108 = por %p106, %p107
      %p109 = scmp.ne.s32.totalorder %s97, %s98
      %p110 = scmp.eq.s32.totalorder %s18, 1
      %p111 = por %p109, %p110
      %p113 = scmp.ne.s32.totalorder %s98, %s112
      %p114 = scmp.eq.s32.totalorder %s18, 0
      %p115 = por %p113, %p114
      %s116 = ssub.s32 %s19, %s38
      %s117 = ssub.s32 %s20, %s34
      %s118 = sor.u32 %s116, %s117
      %s119 = ssub.s32 %s21, %s30
      %s120 = sor.u32 %s118, %s119
      %p121 = scmp.eq.s32.totalorder %s120, 0
      %s123 = sadd.s32 %s122, 1
      %s124 = scalar_select %p121, %s122, %s123
      %p127 = pneg %p121
      %p128 = scmp.eq.s32.totalorder %s12, 1
      %p129 = por %p127, %p128
      %p130 = scmp.ne.s32.totalorder %s122, %s125
      %p131 = scmp.eq.s32.totalorder %s12, 0
      %p132 = por %p130, %p131
      %p133 = scmp.ne.s32.totalorder %s122, %s125
      %p134 = scmp.eq.s32.totalorder %s17, 1
      %p135 = por %p133, %p134
      %p136 = scmp.ne.s32.totalorder %s125, %s126
      %p137 = scmp.eq.s32.totalorder %s17, 0
      %p138 = por %p136, %p137
      %p139 = scmp.ne.s32.totalorder %s125, %s126
      %p140 = scmp.eq.s32.totalorder %s18, 1
      %p141 = por %p139, %p140
      %p143 = scmp.ne.s32.totalorder %s126, %s142
      %p144 = scmp.eq.s32.totalorder %s18, 0
      %p145 = por %p143, %p144
      %p146 = scmp.le.s32.totalorder 1, %s12
      %p147 = scmp.lt.s32.totalorder %s12, 3
      %p148 = pnand %p146, %p147
      %p149 = pneg %p148
      // Predicated region
      $region9: #{tpu_custom_call.1} parent=5 // pred_check
        _
      $region10: #{tpu_custom_call.1} parent=5 // pred_check_branch
        %151 = sbr.rel (%p148) target = $region12
      $region11: #{tpu_custom_call.1} parent=5 // pred_region
        %s152 = ssub.s32 %s12, 1
        // Predicated region
        $region13: #{tpu_custom_call.1} parent=11 // pred_check
          %p153 = pneg %p108
        $region14: #{tpu_custom_call.1} parent=11 // pred_check_branch
          %155 = sbr.rel (%p153) target = $region16
        $region15: #{tpu_custom_call.1} parent=11 // pred_region
          _
        $region16: #{tpu_custom_call.1} parent=11 // pred_fallthru
          _
      $region12: #{tpu_custom_call.1} parent=5 // pred_fallthru
        _
      %p156 = scmp.lt.s32.totalorder %s12, 2
      // Predicated region
      $region17: #{tpu_custom_call.1} parent=5 // pred_check
        %p157 = pneg %p156
      $region18: #{tpu_custom_call.1} parent=5 // pred_check_branch
        %159 = sbr.rel (%p157) target = $region20
      $region19: #{tpu_custom_call.1} parent=5 // pred_region
        // Predicated region
        $region21: #{tpu_custom_call.1} parent=19 // pred_check
          %p160 = pneg %p53
        $region22: #{tpu_custom_call.1} parent=19 // pred_check_branch
          %162 = sbr.rel (%p160) target = $region24
        $region23: #{tpu_custom_call.1} parent=19 // pred_region
          %s163 = smul.u32 16, %s21
          %p164 = scmp.lt.s32.totalorder %s19, 1
          %s165 = scalar_select %p164, %s19, 1
          %p166 = scmp.lt.s32.totalorder %s163, 15
          %s167 = scalar_select %p166, %s163, 15
          %s168 = smul.addr %s165, 16
          %s169 = sadd.s32 %s167, %s168
          %s170 = smul.addr %s169, 8
          %s171 = scalar_lea.vmem %s0, %s170
          %s172 = smul.u32 16, %s21
        $region24: #{tpu_custom_call.1} parent=19 // pred_fallthru
          _
        // Predicated region
        $region25: #{tpu_custom_call.1} parent=19 // pred_check
          %p173 = pneg %p81
        $region26: #{tpu_custom_call.1} parent=19 // pred_check_branch
          %175 = sbr.rel (%p173) target = $region28
        $region27: #{tpu_custom_call.1} parent=19 // pred_region
          %p176 = scmp.lt.s32.totalorder %s19, 1
          %s177 = scalar_select %p176, %s19, 1
          %p178 = scmp.lt.s32.totalorder %s20, 0
          %s179 = scalar_select %p178, %s20, 0
          %s180 = sadd.s32 %s179, %s177
          %s181 = smul.addr %s180, 8
          %s182 = scalar_lea.vmem %s1, %s181
        $region28: #{tpu_custom_call.1} parent=19 // pred_fallthru
          _
      $region20: #{tpu_custom_call.1} parent=5 // pred_fallthru
        _
      %p183 = scmp.le.s32.totalorder 1, %s12
      %p184 = scmp.lt.s32.totalorder %s12, 3
      %p185 = pnand %p183, %p184
      %p186 = pneg %p185
      // Predicated region
      $region29: #{tpu_custom_call.1} parent=5 // pred_check
        _
      $region30: #{tpu_custom_call.1} parent=5 // pred_check_branch
        %188 = sbr.rel (%p185) target = $region32
      $region31: #{tpu_custom_call.1} parent=5 // pred_region
        %s189 = ssub.s32 %s12, 1
        %s190 = smul.u32 16, %s24
        %p191 = scmp.lt.s32.totalorder %s22, 1
        %s192 = scalar_select %p191, %s22, 1
        %p193 = scmp.lt.s32.totalorder %s190, 15
        %s194 = scalar_select %p193, %s190, 15
        %s195 = smul.addr %s192, 16
        %s196 = sadd.s32 %s194, %s195
        %s197 = smul.addr %s196, 8
        %s198 = scalar_lea.vmem %s0, %s197
        %p199 = pneg %p59
        %p200 = pneg %p56
        %p201 = scmp.lt.s32.totalorder %s22, 1
        %s202 = scalar_select %p201, %s22, 1
        %p203 = scmp.lt.s32.totalorder %s23, 0
        %s204 = scalar_select %p203, %s23, 0
        %s205 = sadd.s32 %s204, %s202
        %s206 = smul.addr %s205, 8
        %s207 = scalar_lea.vmem %s1, %s206
        %p208 = pneg %p87
        %p209 = pneg %p84
        %p210 = pneg %p108
        %p211 = pneg %p105
        %p212 = pneg %p138
        %p213 = pneg %p135
        %s214 = sand.u32 %s125, 1
        %s215 = scalar_lea.sflag [#allocation3], %s214
        %s216 = sand.u32 %s125, 1
        %s217 = smul.addr %s216, 8
        %s218 = scalar_lea.vmem [#allocation2], %s217
        %s219 = smul.u32 16, %s24
        %p220 = scmp.lt.s32.totalorder %s22, 1
        %s221 = scalar_select %p220, %s22, 1
        %p222 = scmp.lt.s32.totalorder %s219, 15
        %s223 = scalar_select %p222, %s219, 15
        %s224 = smul.addr %s221, 16
        %s225 = sadd.s32 %s223, %s224
        %s226 = smul.addr %s225, 8
        %s227 = scalar_lea.vmem %s0, %s226
        %s228 = smul.u32 16, %s24
        %p229 = scmp.lt.s32.totalorder %s22, 1
        %s230 = scalar_select %p229, %s22, 1
        %p231 = scmp.lt.s32.totalorder %s23, 0
        %s232 = scalar_select %p231, %s23, 0
        %s233 = sadd.s32 %s232, %s230
        %s234 = smul.addr %s233, 8
        %s235 = scalar_lea.vmem %s1, %s234
        %v236 = vld [vmem:[%s2] sm:$0x1]
        %v237 = vld [vmem:[%s235] sm:$0xff]
        %v238 = vld [vmem:[%s227] sm:$0xff]
        %v239 = vld [vmem:[%s227 + $0x8] sm:$0xff]
        %v240 = vld [vmem:[%s227 + $0x10] sm:$0xff]
        %v241 = vld [vmem:[%s227 + $0x18] sm:$0xff]
        %v242 = vld [vmem:[%s227 + $0x20] sm:$0xff]
        %v243 = vld [vmem:[%s227 + $0x28] sm:$0xff]
        %v244 = vld [vmem:[%s227 + $0x30] sm:$0xff]
        %v245 = vld [vmem:[%s227 + $0x38] sm:$0xff]
        %v246 = vld [vmem:[%s227 + $0x40] sm:$0xff]
        %v247 = vld [vmem:[%s227 + $0x48] sm:$0xff]
        %v248 = vld [vmem:[%s227 + $0x50] sm:$0xff]
        %v249 = vld [vmem:[%s227 + $0x58] sm:$0xff]
        %v250 = vld [vmem:[%s227 + $0x60] sm:$0xff]
        %v251 = vld [vmem:[%s227 + $0x68] sm:$0xff]
        %v252 = vld [vmem:[%s227 + $0x70] sm:$0xff]
        %v253 = vld [vmem:[%s227 + $0x78] sm:$0xff]
        %v255 = vcombine.high %v237, %v237
        %v257 = vunpack.c.l.s4 1966171168
        %v258 = vunpack.c.0.s8 %v257
        %v259 = vlaneseq
        %v260 = vshrl.u32 %v259, 7
        %v261 = vsub.s32 %v258, %v260
        %v262 = vrot.slane %v237, %v261
        %v264 = vunpack.c.l.s4 1966171168
        %v265 = vunpack.c.0.s8 %v264
        %v266 = vlaneseq
        %v267 = vshrl.u32 %v266, 7
        %v268 = vsub.s32 %v265, %v267
        %v269 = vrot.slane %v255, %v268
        %v270 = vcombine.high %v262, %v262
        %v271 = vcombine.high %v269, %v269
        %v273 = vunpack.c.l.s4 1966171168
        %v274 = vunpack.c.0.s8 %v273
        %v275 = vlaneseq
        %v276 = vshrl.u32 %v275, 7
        %v277 = vsub.s32 %v274, %v276
        %v278 = vrot.slane %v262, %v277
        %v280 = vunpack.c.l.s4 1966171168
        %v281 = vunpack.c.0.s8 %v280
        %v282 = vlaneseq
        %v283 = vshrl.u32 %v282, 7
        %v284 = vsub.s32 %v281, %v283
        %v285 = vrot.slane %v269, %v284
        %v287 = vunpack.c.l.s4 1966171168
        %v288 = vunpack.c.0.s8 %v287
        %v289 = vlaneseq
        %v290 = vshrl.u32 %v289, 7
        %v291 = vsub.s32 %v288, %v290
        %v292 = vrot.slane %v270, %v291
        %v294 = vunpack.c.l.s4 1966171168
        %v295 = vunpack.c.0.s8 %v294
        %v296 = vlaneseq
        %v297 = vshrl.u32 %v296, 7
        %v298 = vsub.s32 %v295, %v297
        %v299 = vrot.slane %v271, %v298
        %v300 = vcombine.high %v278, %v278
        %v301 = vcombine.high %v285, %v285
        %v302 = vcombine.high %v292, %v292
        %v303 = vcombine.high %v299, %v299
        %v304 = vlaneseq
        %v305 = vshrl.u32 %v304, 7
        %v306 = vsub.s32 0, %v305
        %v307 = vrot.slane %v278, %v306
        %v308 = vlaneseq
        %v309 = vshrl.u32 %v308, 7
        %v310 = vsub.s32 0, %v309
        %v311 = vrot.slane %v292, %v310
        %v312 = vlaneseq
        %v313 = vshrl.u32 %v312, 7
        %v314 = vsub.s32 0, %v313
        %v315 = vrot.slane %v300, %v314
        %v316 = vlaneseq
        %v317 = vshrl.u32 %v316, 7
        %v318 = vsub.s32 0, %v317
        %v319 = vrot.slane %v302, %v318
        %v320 = vlaneseq
        %v321 = vshrl.u32 %v320, 7
        %v322 = vsub.s32 0, %v321
        %v323 = vrot.slane %v285, %v322
        %v324 = vlaneseq
        %v325 = vshrl.u32 %v324, 7
        %v326 = vsub.s32 0, %v325
        %v327 = vrot.slane %v299, %v326
        %v328 = vlaneseq
        %v329 = vshrl.u32 %v328, 7
        %v330 = vsub.s32 0, %v329
        %v331 = vrot.slane %v301, %v330
        %v332 = vlaneseq
        %v333 = vshrl.u32 %v332, 7
        %v334 = vsub.s32 0, %v333
        %v335 = vrot.slane %v303, %v334
        %v344 = vadd.f32 %v307, %v238
        %v345 = vadd.f32 %v307, %v239
        %v346 = vadd.f32 %v307, %v240
        %v347 = vadd.f32 %v307, %v241
        %v348 = vadd.f32 %v307, %v242
        %v349 = vadd.f32 %v307, %v243
        %v350 = vadd.f32 %v307, %v244
        %v351 = vadd.f32 %v307, %v245
        %v352 = vadd.f32 %v307, %v246
        %v353 = vadd.f32 %v307, %v247
        %v354 = vadd.f32 %v307, %v248
        %v355 = vadd.f32 %v307, %v249
        %v356 = vadd.f32 %v307, %v250
        %v357 = vadd.f32 %v307, %v251
        %v358 = vadd.f32 %v307, %v252
        %v359 = vadd.f32 %v307, %v253
        %v360 = vadd.f32 %v311, %v238
        %v361 = vadd.f32 %v311, %v239
        %v362 = vadd.f32 %v311, %v240
        %v363 = vadd.f32 %v311, %v241
        %v364 = vadd.f32 %v311, %v242
        %v365 = vadd.f32 %v311, %v243
        %v366 = vadd.f32 %v311, %v244
        %v367 = vadd.f32 %v311, %v245
        %v368 = vadd.f32 %v311, %v246
        %v369 = vadd.f32 %v311, %v247
        %v370 = vadd.f32 %v311, %v248
        %v371 = vadd.f32 %v311, %v249
        %v372 = vadd.f32 %v311, %v250
        %v373 = vadd.f32 %v311, %v251
        %v374 = vadd.f32 %v311, %v252
        %v375 = vadd.f32 %v311, %v253
        %v376 = vadd.f32 %v315, %v238
        %v377 = vadd.f32 %v315, %v239
        %v378 = vadd.f32 %v315, %v240
        %v379 = vadd.f32 %v315, %v241
        %v380 = vadd.f32 %v315, %v242
        %v381 = vadd.f32 %v315, %v243
        %v382 = vadd.f32 %v315, %v244
        %v383 = vadd.f32 %v315, %v245
        %v384 = vadd.f32 %v315, %v246
        %v385 = vadd.f32 %v315, %v247
        %v386 = vadd.f32 %v315, %v248
        %v387 = vadd.f32 %v315, %v249
        %v388 = vadd.f32 %v315, %v250
        %v389 = vadd.f32 %v315, %v251
        %v390 = vadd.f32 %v315, %v252
        %v391 = vadd.f32 %v315, %v253
        %v392 = vadd.f32 %v319, %v238
        %v393 = vadd.f32 %v319, %v239
        %v394 = vadd.f32 %v319, %v240
        %v395 = vadd.f32 %v319, %v241
        %v396 = vadd.f32 %v319, %v242
        %v397 = vadd.f32 %v319, %v243
        %v398 = vadd.f32 %v319, %v244
        %v399 = vadd.f32 %v319, %v245
        %v400 = vadd.f32 %v319, %v246
        %v401 = vadd.f32 %v319, %v247
        %v402 = vadd.f32 %v319, %v248
        %v403 = vadd.f32 %v319, %v249
        %v404 = vadd.f32 %v319, %v250
        %v405 = vadd.f32 %v319, %v251
        %v406 = vadd.f32 %v319, %v252
        %v407 = vadd.f32 %v319, %v253
        %v408 = vadd.f32 %v323, %v238
        %v409 = vadd.f32 %v323, %v239
        %v410 = vadd.f32 %v323, %v240
        %v411 = vadd.f32 %v323, %v241
        %v412 = vadd.f32 %v323, %v242
        %v413 = vadd.f32 %v323, %v243
        %v414 = vadd.f32 %v323, %v244
        %v415 = vadd.f32 %v323, %v245
        %v416 = vadd.f32 %v323, %v246
        %v417 = vadd.f32 %v323, %v247
        %v418 = vadd.f32 %v323, %v248
        %v419 = vadd.f32 %v323, %v249
        %v420 = vadd.f32 %v323, %v250
        %v421 = vadd.f32 %v323, %v251
        %v422 = vadd.f32 %v323, %v252
        %v423 = vadd.f32 %v323, %v253
        %v424 = vadd.f32 %v327, %v238
        %v425 = vadd.f32 %v327, %v239
        %v426 = vadd.f32 %v327, %v240
        %v427 = vadd.f32 %v327, %v241
        %v428 = vadd.f32 %v327, %v242
        %v429 = vadd.f32 %v327, %v243
        %v430 = vadd.f32 %v327, %v244
        %v431 = vadd.f32 %v327, %v245
        %v432 = vadd.f32 %v327, %v246
        %v433 = vadd.f32 %v327, %v247
        %v434 = vadd.f32 %v327, %v248
        %v435 = vadd.f32 %v327, %v249
        %v436 = vadd.f32 %v327, %v250
        %v437 = vadd.f32 %v327, %v251
        %v438 = vadd.f32 %v327, %v252
        %v439 = vadd.f32 %v327, %v253
        %v440 = vadd.f32 %v331, %v238
        %v441 = vadd.f32 %v331, %v239
        %v442 = vadd.f32 %v331, %v240
        %v443 = vadd.f32 %v331, %v241
        %v444 = vadd.f32 %v331, %v242
        %v445 = vadd.f32 %v331, %v243
        %v446 = vadd.f32 %v331, %v244
        %v447 = vadd.f32 %v331, %v245
        %v448 = vadd.f32 %v331, %v246
        %v449 = vadd.f32 %v331, %v247
        %v450 = vadd.f32 %v331, %v248
        %v451 = vadd.f32 %v331, %v249
        %v452 = vadd.f32 %v331, %v250
        %v453 = vadd.f32 %v331, %v251
        %v454 = vadd.f32 %v331, %v252
        %v455 = vadd.f32 %v331, %v253
        %v456 = vadd.f32 %v335, %v238
        %v457 = vadd.f32 %v335, %v239
        %v458 = vadd.f32 %v335, %v240
        %v459 = vadd.f32 %v335, %v241
        %v460 = vadd.f32 %v335, %v242
        %v461 = vadd.f32 %v335, %v243
        %v462 = vadd.f32 %v335, %v244
        %v463 = vadd.f32 %v335, %v245
        %v464 = vadd.f32 %v335, %v246
        %v465 = vadd.f32 %v335, %v247
        %v466 = vadd.f32 %v335, %v248
        %v467 = vadd.f32 %v335, %v249
        %v468 = vadd.f32 %v335, %v250
        %v469 = vadd.f32 %v335, %v251
        %v470 = vadd.f32 %v335, %v252
        %v471 = vadd.f32 %v335, %v253
        %v472 = vtanh.pop %v344
        %v473 = vtanh.pop %v345
        %v474 = vtanh.pop %v346
        %v475 = vtanh.pop %v347
        %v476 = vtanh.pop %v348
        %v477 = vtanh.pop %v349
        %v478 = vtanh.pop %v350
        %v479 = vtanh.pop %v351
        %v480 = vtanh.pop %v352
        %v481 = vtanh.pop %v353
        %v482 = vtanh.pop %v354
        %v483 = vtanh.pop %v355
        %v484 = vtanh.pop %v356
        %v485 = vtanh.pop %v357
        %v486 = vtanh.pop %v358
        %v487 = vtanh.pop %v359
        %v488 = vtanh.pop %v360
        %v489 = vtanh.pop %v361
        %v490 = vtanh.pop %v362
        %v491 = vtanh.pop %v363
        %v492 = vtanh.pop %v364
        %v493 = vtanh.pop %v365
        %v494 = vtanh.pop %v366
        %v495 = vtanh.pop %v367
        %v496 = vtanh.pop %v368
        %v497 = vtanh.pop %v369
        %v498 = vtanh.pop %v370
        %v499 = vtanh.pop %v371
        %v500 = vtanh.pop %v372
        %v501 = vtanh.pop %v373
        %v502 = vtanh.pop %v374
        %v503 = vtanh.pop %v375
        %v504 = vtanh.pop %v376
        %v505 = vtanh.pop %v377
        %v506 = vtanh.pop %v378
        %v507 = vtanh.pop %v379
        %v508 = vtanh.pop %v380
        %v509 = vtanh.pop %v381
        %v510 = vtanh.pop %v382
        %v511 = vtanh.pop %v383
        %v512 = vtanh.pop %v384
        %v513 = vtanh.pop %v385
        %v514 = vtanh.pop %v386
        %v515 = vtanh.pop %v387
        %v516 = vtanh.pop %v388
        %v517 = vtanh.pop %v389
        %v518 = vtanh.pop %v390
        %v519 = vtanh.pop %v391
        %v520 = vtanh.pop %v392
        %v521 = vtanh.pop %v393
        %v522 = vtanh.pop %v394
        %v523 = vtanh.pop %v395
        %v524 = vtanh.pop %v396
        %v525 = vtanh.pop %v397
        %v526 = vtanh.pop %v398
        %v527 = vtanh.pop %v399
        %v528 = vtanh.pop %v400
        %v529 = vtanh.pop %v401
        %v530 = vtanh.pop %v402
        %v531 = vtanh.pop %v403
        %v532 = vtanh.pop %v404
        %v533 = vtanh.pop %v405
        %v534 = vtanh.pop %v406
        %v535 = vtanh.pop %v407
        %v536 = vtanh.pop %v408
        %v537 = vtanh.pop %v409
        %v538 = vtanh.pop %v410
        %v539 = vtanh.pop %v411
        %v540 = vtanh.pop %v412
        %v541 = vtanh.pop %v413
        %v542 = vtanh.pop %v414
        %v543 = vtanh.pop %v415
        %v544 = vtanh.pop %v416
        %v545 = vtanh.pop %v417
        %v546 = vtanh.pop %v418
        %v547 = vtanh.pop %v419
        %v548 = vtanh.pop %v420
        %v549 = vtanh.pop %v421
        %v550 = vtanh.pop %v422
        %v551 = vtanh.pop %v423
        %v552 = vtanh.pop %v424
        %v553 = vtanh.pop %v425
        %v554 = vtanh.pop %v426
        %v555 = vtanh.pop %v427
        %v556 = vtanh.pop %v428
        %v557 = vtanh.pop %v429
        %v558 = vtanh.pop %v430
        %v559 = vtanh.pop %v431
        %v560 = vtanh.pop %v432
        %v561 = vtanh.pop %v433
        %v562 = vtanh.pop %v434
        %v563 = vtanh.pop %v435
        %v564 = vtanh.pop %v436
        %v565 = vtanh.pop %v437
        %v566 = vtanh.pop %v438
        %v567 = vtanh.pop %v439
        %v568 = vtanh.pop %v440
        %v569 = vtanh.pop %v441
        %v570 = vtanh.pop %v442
        %v571 = vtanh.pop %v443
        %v572 = vtanh.pop %v444
        %v573 = vtanh.pop %v445
        %v574 = vtanh.pop %v446
        %v575 = vtanh.pop %v447
        %v576 = vtanh.pop %v448
        %v577 = vtanh.pop %v449
        %v578 = vtanh.pop %v450
        %v579 = vtanh.pop %v451
        %v580 = vtanh.pop %v452
        %v581 = vtanh.pop %v453
        %v582 = vtanh.pop %v454
        %v583 = vtanh.pop %v455
        %v584 = vtanh.pop %v456
        %v585 = vtanh.pop %v457
        %v586 = vtanh.pop %v458
        %v587 = vtanh.pop %v459
        %v588 = vtanh.pop %v460
        %v589 = vtanh.pop %v461
        %v590 = vtanh.pop %v462
        %v591 = vtanh.pop %v463
        %v592 = vtanh.pop %v464
        %v593 = vtanh.pop %v465
        %v594 = vtanh.pop %v466
        %v595 = vtanh.pop %v467
        %v596 = vtanh.pop %v468
        %v597 = vtanh.pop %v469
        %v598 = vtanh.pop %v470
        %v599 = vtanh.pop %v471
        %v601 = vlaneseq
        %v602 = vshrl.u32 %v601, 7
        %v603 = vsub.s32 0, %v602
        %v604 = vrot.slane %v236, %v603
        %v606 = vmul.f32 %v472, %v604
        %v607 = vmul.f32 %v473, %v604
        %v608 = vmul.f32 %v474, %v604
        %v609 = vmul.f32 %v475, %v604
        %v610 = vmul.f32 %v476, %v604
        %v611 = vmul.f32 %v477, %v604
        %v612 = vmul.f32 %v478, %v604
        %v613 = vmul.f32 %v479, %v604
        %v614 = vmul.f32 %v480, %v604
        %v615 = vmul.f32 %v481, %v604
        %v616 = vmul.f32 %v482, %v604
        %v617 = vmul.f32 %v483, %v604
        %v618 = vmul.f32 %v484, %v604
        %v619 = vmul.f32 %v485, %v604
        %v620 = vmul.f32 %v486, %v604
        %v621 = vmul.f32 %v487, %v604
        %v622 = vmul.f32 %v488, %v604
        %v623 = vmul.f32 %v489, %v604
        %v624 = vmul.f32 %v490, %v604
        %v625 = vmul.f32 %v491, %v604
        %v626 = vmul.f32 %v492, %v604
        %v627 = vmul.f32 %v493, %v604
        %v628 = vmul.f32 %v494, %v604
        %v629 = vmul.f32 %v495, %v604
        %v630 = vmul.f32 %v496, %v604
        %v631 = vmul.f32 %v497, %v604
        %v632 = vmul.f32 %v498, %v604
        %v633 = vmul.f32 %v499, %v604
        %v634 = vmul.f32 %v500, %v604
        %v635 = vmul.f32 %v501, %v604
        %v636 = vmul.f32 %v502, %v604
        %v637 = vmul.f32 %v503, %v604
        %v638 = vmul.f32 %v504, %v604
        %v639 = vmul.f32 %v505, %v604
        %v640 = vmul.f32 %v506, %v604
        %v641 = vmul.f32 %v507, %v604
        %v642 = vmul.f32 %v508, %v604
        %v643 = vmul.f32 %v509, %v604
        %v644 = vmul.f32 %v510, %v604
        %v645 = vmul.f32 %v511, %v604
        %v646 = vmul.f32 %v512, %v604
        %v647 = vmul.f32 %v513, %v604
        %v648 = vmul.f32 %v514, %v604
        %v649 = vmul.f32 %v515, %v604
        %v650 = vmul.f32 %v516, %v604
        %v651 = vmul.f32 %v517, %v604
        %v652 = vmul.f32 %v518, %v604
        %v653 = vmul.f32 %v519, %v604
        %v654 = vmul.f32 %v520, %v604
        %v655 = vmul.f32 %v521, %v604
        %v656 = vmul.f32 %v522, %v604
        %v657 = vmul.f32 %v523, %v604
        %v658 = vmul.f32 %v524, %v604
        %v659 = vmul.f32 %v525, %v604
        %v660 = vmul.f32 %v526, %v604
        %v661 = vmul.f32 %v527, %v604
        %v662 = vmul.f32 %v528, %v604
        %v663 = vmul.f32 %v529, %v604
        %v664 = vmul.f32 %v530, %v604
        %v665 = vmul.f32 %v531, %v604
        %v666 = vmul.f32 %v532, %v604
        %v667 = vmul.f32 %v533, %v604
        %v668 = vmul.f32 %v534, %v604
        %v669 = vmul.f32 %v535, %v604
        %v670 = vmul.f32 %v536, %v604
        %v671 = vmul.f32 %v537, %v604
        %v672 = vmul.f32 %v538, %v604
        %v673 = vmul.f32 %v539, %v604
        %v674 = vmul.f32 %v540, %v604
        %v675 = vmul.f32 %v541, %v604
        %v676 = vmul.f32 %v542, %v604
        %v677 = vmul.f32 %v543, %v604
        %v678 = vmul.f32 %v544, %v604
        %v679 = vmul.f32 %v545, %v604
        %v680 = vmul.f32 %v546, %v604
        %v681 = vmul.f32 %v547, %v604
        %v682 = vmul.f32 %v548, %v604
        %v683 = vmul.f32 %v549, %v604
        %v684 = vmul.f32 %v550, %v604
        %v685 = vmul.f32 %v551, %v604
        %v686 = vmul.f32 %v552, %v604
        %v687 = vmul.f32 %v553, %v604
        %v688 = vmul.f32 %v554, %v604
        %v689 = vmul.f32 %v555, %v604
        %v690 = vmul.f32 %v556, %v604
        %v691 = vmul.f32 %v557, %v604
        %v692 = vmul.f32 %v558, %v604
        %v693 = vmul.f32 %v559, %v604
        %v694 = vmul.f32 %v560, %v604
        %v695 = vmul.f32 %v561, %v604
        %v696 = vmul.f32 %v562, %v604
        %v697 = vmul.f32 %v563, %v604
        %v698 = vmul.f32 %v564, %v604
        %v699 = vmul.f32 %v565, %v604
        %v700 = vmul.f32 %v566, %v604
        %v701 = vmul.f32 %v567, %v604
        %v702 = vmul.f32 %v568, %v604
        %v703 = vmul.f32 %v569, %v604
        %v704 = vmul.f32 %v570, %v604
        %v705 = vmul.f32 %v571, %v604
        %v706 = vmul.f32 %v572, %v604
        %v707 = vmul.f32 %v573, %v604
        %v708 = vmul.f32 %v574, %v604
        %v709 = vmul.f32 %v575, %v604
        %v710 = vmul.f32 %v576, %v604
        %v711 = vmul.f32 %v577, %v604
        %v712 = vmul.f32 %v578, %v604
        %v713 = vmul.f32 %v579, %v604
        %v714 = vmul.f32 %v580, %v604
        %v715 = vmul.f32 %v581, %v604
        %v716 = vmul.f32 %v582, %v604
        %v717 = vmul.f32 %v583, %v604
        %v718 = vmul.f32 %v584, %v604
        %v719 = vmul.f32 %v585, %v604
        %v720 = vmul.f32 %v586, %v604
        %v721 = vmul.f32 %v587, %v604
        %v722 = vmul.f32 %v588, %v604
        %v723 = vmul.f32 %v589, %v604
        %v724 = vmul.f32 %v590, %v604
        %v725 = vmul.f32 %v591, %v604
        %v726 = vmul.f32 %v592, %v604
        %v727 = vmul.f32 %v593, %v604
        %v728 = vmul.f32 %v594, %v604
        %v729 = vmul.f32 %v595, %v604
        %v730 = vmul.f32 %v596, %v604
        %v731 = vmul.f32 %v597, %v604
        %v732 = vmul.f32 %v598, %v604
        %v733 = vmul.f32 %v599, %v604
        %vm734 = vcmask 261120
        %v735 = vsel %vm734, %v606, 0.0
        %736 = vadd.xlane.f32.xlu0 %v735
        %v737 = vpop.xlane.xlu0 %736
        %v738 = vsel %vm734, %v607, 0.0
        %739 = vadd.xlane.f32.xlu0 %v738
        %v740 = vpop.xlane.xlu0 %739
        %v741 = vsel %vm734, %v608, 0.0
        %742 = vadd.xlane.f32.xlu0 %v741
        %v743 = vpop.xlane.xlu0 %742
        %v744 = vsel %vm734, %v609, 0.0
        %745 = vadd.xlane.f32.xlu0 %v744
        %v746 = vpop.xlane.xlu0 %745
        %v747 = vsel %vm734, %v610, 0.0
        %748 = vadd.xlane.f32.xlu0 %v747
        %v749 = vpop.xlane.xlu0 %748
        %v750 = vsel %vm734, %v611, 0.0
        %751 = vadd.xlane.f32.xlu0 %v750
        %v752 = vpop.xlane.xlu0 %751
        %v753 = vsel %vm734, %v612, 0.0
        %754 = vadd.xlane.f32.xlu0 %v753
        %v755 = vpop.xlane.xlu0 %754
        %v756 = vsel %vm734, %v613, 0.0
        %757 = vadd.xlane.f32.xlu0 %v756
        %v758 = vpop.xlane.xlu0 %757
        %v759 = vsel %vm734, %v614, 0.0
        %760 = vadd.xlane.f32.xlu0 %v759
        %v761 = vpop.xlane.xlu0 %760
        %v762 = vsel %vm734, %v615, 0.0
        %763 = vadd.xlane.f32.xlu0 %v762
        %v764 = vpop.xlane.xlu0 %763
        %v765 = vsel %vm734, %v616, 0.0
        %766 = vadd.xlane.f32.xlu0 %v765
        %v767 = vpop.xlane.xlu0 %766
        %v768 = vsel %vm734, %v617, 0.0
        %769 = vadd.xlane.f32.xlu0 %v768
        %v770 = vpop.xlane.xlu0 %769
        %v771 = vsel %vm734, %v618, 0.0
        %772 = vadd.xlane.f32.xlu0 %v771
        %v773 = vpop.xlane.xlu0 %772
        %v774 = vsel %vm734, %v619, 0.0
        %775 = vadd.xlane.f32.xlu0 %v774
        %v776 = vpop.xlane.xlu0 %775
        %v777 = vsel %vm734, %v620, 0.0
        %778 = vadd.xlane.f32.xlu0 %v777
        %v779 = vpop.xlane.xlu0 %778
        %v780 = vsel %vm734, %v621, 0.0
        %781 = vadd.xlane.f32.xlu0 %v780
        %v782 = vpop.xlane.xlu0 %781
        %v783 = vsel %vm734, %v622, 0.0
        %784 = vadd.xlane.f32.xlu0 %v783
        %v785 = vpop.xlane.xlu0 %784
        %v786 = vsel %vm734, %v623, 0.0
        %787 = vadd.xlane.f32.xlu0 %v786
        %v788 = vpop.xlane.xlu0 %787
        %v789 = vsel %vm734, %v624, 0.0
        %790 = vadd.xlane.f32.xlu0 %v789
        %v791 = vpop.xlane.xlu0 %790
        %v792 = vsel %vm734, %v625, 0.0
        %793 = vadd.xlane.f32.xlu0 %v792
        %v794 = vpop.xlane.xlu0 %793
        %v795 = vsel %vm734, %v626, 0.0
        %796 = vadd.xlane.f32.xlu0 %v795
        %v797 = vpop.xlane.xlu0 %796
        %v798 = vsel %vm734, %v627, 0.0
        %799 = vadd.xlane.f32.xlu0 %v798
        %v800 = vpop.xlane.xlu0 %799
        %v801 = vsel %vm734, %v628, 0.0
        %802 = vadd.xlane.f32.xlu0 %v801
        %v803 = vpop.xlane.xlu0 %802
        %v804 = vsel %vm734, %v629, 0.0
        %805 = vadd.xlane.f32.xlu0 %v804
        %v806 = vpop.xlane.xlu0 %805
        %v807 = vsel %vm734, %v630, 0.0
        %808 = vadd.xlane.f32.xlu0 %v807
        %v809 = vpop.xlane.xlu0 %808
        %v810 = vsel %vm734, %v631, 0.0
        %811 = vadd.xlane.f32.xlu0 %v810
        %v812 = vpop.xlane.xlu0 %811
        %v813 = vsel %vm734, %v632, 0.0
        %814 = vadd.xlane.f32.xlu0 %v813
        %v815 = vpop.xlane.xlu0 %814
        %v816 = vsel %vm734, %v633, 0.0
        %817 = vadd.xlane.f32.xlu0 %v816
        %v818 = vpop.xlane.xlu0 %817
        %v819 = vsel %vm734, %v634, 0.0
        %820 = vadd.xlane.f32.xlu0 %v819
        %v821 = vpop.xlane.xlu0 %820
        %v822 = vsel %vm734, %v635, 0.0
        %823 = vadd.xlane.f32.xlu0 %v822
        %v824 = vpop.xlane.xlu0 %823
        %v825 = vsel %vm734, %v636, 0.0
        %826 = vadd.xlane.f32.xlu0 %v825
        %v827 = vpop.xlane.xlu0 %826
        %v828 = vsel %vm734, %v637, 0.0
        %829 = vadd.xlane.f32.xlu0 %v828
        %v830 = vpop.xlane.xlu0 %829
        %v831 = vsel %vm734, %v638, 0.0
        %832 = vadd.xlane.f32.xlu0 %v831
        %v833 = vpop.xlane.xlu0 %832
        %v834 = vsel %vm734, %v639, 0.0
        %835 = vadd.xlane.f32.xlu0 %v834
        %v836 = vpop.xlane.xlu0 %835
        %v837 = vsel %vm734, %v640, 0.0
        %838 = vadd.xlane.f32.xlu0 %v837
        %v839 = vpop.xlane.xlu0 %838
        %v840 = vsel %vm734, %v641, 0.0
        %841 = vadd.xlane.f32.xlu0 %v840
        %v842 = vpop.xlane.xlu0 %841
        %v843 = vsel %vm734, %v642, 0.0
        %844 = vadd.xlane.f32.xlu0 %v843
        %v845 = vpop.xlane.xlu0 %844
        %v846 = vsel %vm734, %v643, 0.0
        %847 = vadd.xlane.f32.xlu0 %v846
        %v848 = vpop.xlane.xlu0 %847
        %v849 = vsel %vm734, %v644, 0.0
        %850 = vadd.xlane.f32.xlu0 %v849
        %v851 = vpop.xlane.xlu0 %850
        %v852 = vsel %vm734, %v645, 0.0
        %853 = vadd.xlane.f32.xlu0 %v852
        %v854 = vpop.xlane.xlu0 %853
        %v855 = vsel %vm734, %v646, 0.0
        %856 = vadd.xlane.f32.xlu0 %v855
        %v857 = vpop.xlane.xlu0 %856
        %v858 = vsel %vm734, %v647, 0.0
        %859 = vadd.xlane.f32.xlu0 %v858
        %v860 = vpop.xlane.xlu0 %859
        %v861 = vsel %vm734, %v648, 0.0
        %862 = vadd.xlane.f32.xlu0 %v861
        %v863 = vpop.xlane.xlu0 %862
        %v864 = vsel %vm734, %v649, 0.0
        %865 = vadd.xlane.f32.xlu0 %v864
        %v866 = vpop.xlane.xlu0 %865
        %v867 = vsel %vm734, %v650, 0.0
        %868 = vadd.xlane.f32.xlu0 %v867
        %v869 = vpop.xlane.xlu0 %868
        %v870 = vsel %vm734, %v651, 0.0
        %871 = vadd.xlane.f32.xlu0 %v870
        %v872 = vpop.xlane.xlu0 %871
        %v873 = vsel %vm734, %v652, 0.0
        %874 = vadd.xlane.f32.xlu0 %v873
        %v875 = vpop.xlane.xlu0 %874
        %v876 = vsel %vm734, %v653, 0.0
        %877 = vadd.xlane.f32.xlu0 %v876
        %v878 = vpop.xlane.xlu0 %877
        %v879 = vsel %vm734, %v654, 0.0
        %880 = vadd.xlane.f32.xlu0 %v879
        %v881 = vpop.xlane.xlu0 %880
        %v882 = vsel %vm734, %v655, 0.0
        %883 = vadd.xlane.f32.xlu0 %v882
        %v884 = vpop.xlane.xlu0 %883
        %v885 = vsel %vm734, %v656, 0.0
        %886 = vadd.xlane.f32.xlu0 %v885
        %v887 = vpop.xlane.xlu0 %886
        %v888 = vsel %vm734, %v657, 0.0
        %889 = vadd.xlane.f32.xlu0 %v888
        %v890 = vpop.xlane.xlu0 %889
        %v891 = vsel %vm734, %v658, 0.0
        %892 = vadd.xlane.f32.xlu0 %v891
        %v893 = vpop.xlane.xlu0 %892
        %v894 = vsel %vm734, %v659, 0.0
        %895 = vadd.xlane.f32.xlu0 %v894
        %v896 = vpop.xlane.xlu0 %895
        %v897 = vsel %vm734, %v660, 0.0
        %898 = vadd.xlane.f32.xlu0 %v897
        %v899 = vpop.xlane.xlu0 %898
        %v900 = vsel %vm734, %v661, 0.0
        %901 = vadd.xlane.f32.xlu0 %v900
        %v902 = vpop.xlane.xlu0 %901
        %v903 = vsel %vm734, %v662, 0.0
        %904 = vadd.xlane.f32.xlu0 %v903
        %v905 = vpop.xlane.xlu0 %904
        %v906 = vsel %vm734, %v663, 0.0
        %907 = vadd.xlane.f32.xlu0 %v906
        %v908 = vpop.xlane.xlu0 %907
        %v909 = vsel %vm734, %v664, 0.0
        %910 = vadd.xlane.f32.xlu0 %v909
        %v911 = vpop.xlane.xlu0 %910
        %v912 = vsel %vm734, %v665, 0.0
        %913 = vadd.xlane.f32.xlu0 %v912
        %v914 = vpop.xlane.xlu0 %913
        %v915 = vsel %vm734, %v666, 0.0
        %916 = vadd.xlane.f32.xlu0 %v915
        %v917 = vpop.xlane.xlu0 %916
        %v918 = vsel %vm734, %v667, 0.0
        %919 = vadd.xlane.f32.xlu0 %v918
        %v920 = vpop.xlane.xlu0 %919
        %v921 = vsel %vm734, %v668, 0.0
        %922 = vadd.xlane.f32.xlu0 %v921
        %v923 = vpop.xlane.xlu0 %922
        %v924 = vsel %vm734, %v669, 0.0
        %925 = vadd.xlane.f32.xlu0 %v924
        %v926 = vpop.xlane.xlu0 %925
        %v927 = vsel %vm734, %v670, 0.0
        %928 = vadd.xlane.f32.xlu0 %v927
        %v929 = vpop.xlane.xlu0 %928
        %v930 = vsel %vm734, %v671, 0.0
        %931 = vadd.xlane.f32.xlu0 %v930
        %v932 = vpop.xlane.xlu0 %931
        %v933 = vsel %vm734, %v672, 0.0
        %934 = vadd.xlane.f32.xlu0 %v933
        %v935 = vpop.xlane.xlu0 %934
        %v936 = vsel %vm734, %v673, 0.0
        %937 = vadd.xlane.f32.xlu0 %v936
        %v938 = vpop.xlane.xlu0 %937
        %v939 = vsel %vm734, %v674, 0.0
        %940 = vadd.xlane.f32.xlu0 %v939
        %v941 = vpop.xlane.xlu0 %940
        %v942 = vsel %vm734, %v675, 0.0
        %943 = vadd.xlane.f32.xlu0 %v942
        %v944 = vpop.xlane.xlu0 %943
        %v945 = vsel %vm734, %v676, 0.0
        %946 = vadd.xlane.f32.xlu0 %v945
        %v947 = vpop.xlane.xlu0 %946
        %v948 = vsel %vm734, %v677, 0.0
        %949 = vadd.xlane.f32.xlu0 %v948
        %v950 = vpop.xlane.xlu0 %949
        %v951 = vsel %vm734, %v678, 0.0
        %952 = vadd.xlane.f32.xlu0 %v951
        %v953 = vpop.xlane.xlu0 %952
        %v954 = vsel %vm734, %v679, 0.0
        %955 = vadd.xlane.f32.xlu0 %v954
        %v956 = vpop.xlane.xlu0 %955
        %v957 = vsel %vm734, %v680, 0.0
        %958 = vadd.xlane.f32.xlu0 %v957
        %v959 = vpop.xlane.xlu0 %958
        %v960 = vsel %vm734, %v681, 0.0
        %961 = vadd.xlane.f32.xlu0 %v960
        %v962 = vpop.xlane.xlu0 %961
        %v963 = vsel %vm734, %v682, 0.0
        %964 = vadd.xlane.f32.xlu0 %v963
        %v965 = vpop.xlane.xlu0 %964
        %v966 = vsel %vm734, %v683, 0.0
        %967 = vadd.xlane.f32.xlu0 %v966
        %v968 = vpop.xlane.xlu0 %967
        %v969 = vsel %vm734, %v684, 0.0
        %970 = vadd.xlane.f32.xlu0 %v969
        %v971 = vpop.xlane.xlu0 %970
        %v972 = vsel %vm734, %v685, 0.0
        %973 = vadd.xlane.f32.xlu0 %v972
        %v974 = vpop.xlane.xlu0 %973
        %v975 = vsel %vm734, %v686, 0.0
        %976 = vadd.xlane.f32.xlu0 %v975
        %v977 = vpop.xlane.xlu0 %976
        %v978 = vsel %vm734, %v687, 0.0
        %979 = vadd.xlane.f32.xlu0 %v978
        %v980 = vpop.xlane.xlu0 %979
        %v981 = vsel %vm734, %v688, 0.0
        %982 = vadd.xlane.f32.xlu0 %v981
        %v983 = vpop.xlane.xlu0 %982
        %v984 = vsel %vm734, %v689, 0.0
        %985 = vadd.xlane.f32.xlu0 %v984
        %v986 = vpop.xlane.xlu0 %985
        %v987 = vsel %vm734, %v690, 0.0
        %988 = vadd.xlane.f32.xlu0 %v987
        %v989 = vpop.xlane.xlu0 %988
        %v990 = vsel %vm734, %v691, 0.0
        %991 = vadd.xlane.f32.xlu0 %v990
        %v992 = vpop.xlane.xlu0 %991
        %v993 = vsel %vm734, %v692, 0.0
        %994 = vadd.xlane.f32.xlu0 %v993
        %v995 = vpop.xlane.xlu0 %994
        %v996 = vsel %vm734, %v693, 0.0
        %997 = vadd.xlane.f32.xlu0 %v996
        %v998 = vpop.xlane.xlu0 %997
        %v999 = vsel %vm734, %v694, 0.0
        %1000 = vadd.xlane.f32.xlu0 %v999
        %v1001 = vpop.xlane.xlu0 %1000
        %v1002 = vsel %vm734, %v695, 0.0
        %1003 = vadd.xlane.f32.xlu0 %v1002
        %v1004 = vpop.xlane.xlu0 %1003
        %v1005 = vsel %vm734, %v696, 0.0
        %1006 = vadd.xlane.f32.xlu0 %v1005
        %v1007 = vpop.xlane.xlu0 %1006
        %v1008 = vsel %vm734, %v697, 0.0
        %1009 = vadd.xlane.f32.xlu0 %v1008
        %v1010 = vpop.xlane.xlu0 %1009
        %v1011 = vsel %vm734, %v698, 0.0
        %1012 = vadd.xlane.f32.xlu0 %v1011
        %v1013 = vpop.xlane.xlu0 %1012
        %v1014 = vsel %vm734, %v699, 0.0
        %1015 = vadd.xlane.f32.xlu0 %v1014
        %v1016 = vpop.xlane.xlu0 %1015
        %v1017 = vsel %vm734, %v700, 0.0
        %1018 = vadd.xlane.f32.xlu0 %v1017
        %v1019 = vpop.xlane.xlu0 %1018
        %v1020 = vsel %vm734, %v701, 0.0
        %1021 = vadd.xlane.f32.xlu0 %v1020
        %v1022 = vpop.xlane.xlu0 %1021
        %v1023 = vsel %vm734, %v702, 0.0
        %1024 = vadd.xlane.f32.xlu0 %v1023
        %v1025 = vpop.xlane.xlu0 %1024
        %v1026 = vsel %vm734, %v703, 0.0
        %1027 = vadd.xlane.f32.xlu0 %v1026
        %v1028 = vpop.xlane.xlu0 %1027
        %v1029 = vsel %vm734, %v704, 0.0
        %1030 = vadd.xlane.f32.xlu0 %v1029
        %v1031 = vpop.xlane.xlu0 %1030
        %v1032 = vsel %vm734, %v705, 0.0
        %1033 = vadd.xlane.f32.xlu0 %v1032
        %v1034 = vpop.xlane.xlu0 %1033
        %v1035 = vsel %vm734, %v706, 0.0
        %1036 = vadd.xlane.f32.xlu0 %v1035
        %v1037 = vpop.xlane.xlu0 %1036
        %v1038 = vsel %vm734, %v707, 0.0
        %1039 = vadd.xlane.f32.xlu0 %v1038
        %v1040 = vpop.xlane.xlu0 %1039
        %v1041 = vsel %vm734, %v708, 0.0
        %1042 = vadd.xlane.f32.xlu0 %v1041
        %v1043 = vpop.xlane.xlu0 %1042
        %v1044 = vsel %vm734, %v709, 0.0
        %1045 = vadd.xlane.f32.xlu0 %v1044
        %v1046 = vpop.xlane.xlu0 %1045
        %v1047 = vsel %vm734, %v710, 0.0
        %1048 = vadd.xlane.f32.xlu0 %v1047
        %v1049 = vpop.xlane.xlu0 %1048
        %v1050 = vsel %vm734, %v711, 0.0
        %1051 = vadd.xlane.f32.xlu0 %v1050
        %v1052 = vpop.xlane.xlu0 %1051
        %v1053 = vsel %vm734, %v712, 0.0
        %1054 = vadd.xlane.f32.xlu0 %v1053
        %v1055 = vpop.xlane.xlu0 %1054
        %v1056 = vsel %vm734, %v713, 0.0
        %1057 = vadd.xlane.f32.xlu0 %v1056
        %v1058 = vpop.xlane.xlu0 %1057
        %v1059 = vsel %vm734, %v714, 0.0
        %1060 = vadd.xlane.f32.xlu0 %v1059
        %v1061 = vpop.xlane.xlu0 %1060
        %v1062 = vsel %vm734, %v715, 0.0
        %1063 = vadd.xlane.f32.xlu0 %v1062
        %v1064 = vpop.xlane.xlu0 %1063
        %v1065 = vsel %vm734, %v716, 0.0
        %1066 = vadd.xlane.f32.xlu0 %v1065
        %v1067 = vpop.xlane.xlu0 %1066
        %v1068 = vsel %vm734, %v717, 0.0
        %1069 = vadd.xlane.f32.xlu0 %v1068
        %v1070 = vpop.xlane.xlu0 %1069
        %v1071 = vsel %vm734, %v718, 0.0
        %1072 = vadd.xlane.f32.xlu0 %v1071
        %v1073 = vpop.xlane.xlu0 %1072
        %v1074 = vsel %vm734, %v719, 0.0
        %1075 = vadd.xlane.f32.xlu0 %v1074
        %v1076 = vpop.xlane.xlu0 %1075
        %v1077 = vsel %vm734, %v720, 0.0
        %1078 = vadd.xlane.f32.xlu0 %v1077
        %v1079 = vpop.xlane.xlu0 %1078
        %v1080 = vsel %vm734, %v721, 0.0
        %1081 = vadd.xlane.f32.xlu0 %v1080
        %v1082 = vpop.xlane.xlu0 %1081
        %v1083 = vsel %vm734, %v722, 0.0
        %1084 = vadd.xlane.f32.xlu0 %v1083
        %v1085 = vpop.xlane.xlu0 %1084
        %v1086 = vsel %vm734, %v723, 0.0
        %1087 = vadd.xlane.f32.xlu0 %v1086
        %v1088 = vpop.xlane.xlu0 %1087
        %v1089 = vsel %vm734, %v724, 0.0
        %1090 = vadd.xlane.f32.xlu0 %v1089
        %v1091 = vpop.xlane.xlu0 %1090
        %v1092 = vsel %vm734, %v725, 0.0
        %1093 = vadd.xlane.f32.xlu0 %v1092
        %v1094 = vpop.xlane.xlu0 %1093
        %v1095 = vsel %vm734, %v726, 0.0
        %1096 = vadd.xlane.f32.xlu0 %v1095
        %v1097 = vpop.xlane.xlu0 %1096
        %v1098 = vsel %vm734, %v727, 0.0
        %1099 = vadd.xlane.f32.xlu0 %v1098
        %v1100 = vpop.xlane.xlu0 %1099
        %v1101 = vsel %vm734, %v728, 0.0
        %1102 = vadd.xlane.f32.xlu0 %v1101
        %v1103 = vpop.xlane.xlu0 %1102
        %v1104 = vsel %vm734, %v729, 0.0
        %1105 = vadd.xlane.f32.xlu0 %v1104
        %v1106 = vpop.xlane.xlu0 %1105
        %v1107 = vsel %vm734, %v730, 0.0
        %1108 = vadd.xlane.f32.xlu0 %v1107
        %v1109 = vpop.xlane.xlu0 %1108
        %v1110 = vsel %vm734, %v731, 0.0
        %1111 = vadd.xlane.f32.xlu0 %v1110
        %v1112 = vpop.xlane.xlu0 %1111
        %v1113 = vsel %vm734, %v732, 0.0
        %1114 = vadd.xlane.f32.xlu0 %v1113
        %v1115 = vpop.xlane.xlu0 %1114
        %v1116 = vsel %vm734, %v733, 0.0
        %1117 = vadd.xlane.f32.xlu0 %v1116
        %v1118 = vpop.xlane.xlu0 %1117
        %v1247 = vlaneseq
        %v1248 = vand.u32 %v1247, 127
        %v1249 = vlaneseq
        %v1250 = vshrl.u32 %v1249, 7
        %v1251 = vsub.s32 %v1248, %v1250
        %v1252 = vrot.slane %v737, %v1251
        %v1253 = vadd.s32 %v1248, 4294967288
        %v1254 = vlaneseq
        %v1255 = vshrl.u32 %v1254, 7
        %v1256 = vsub.s32 %v1253, %v1255
        %v1257 = vrot.slane %v740, %v1256
        %vm1258 = vcmask 130112
        %v1259 = vsel %vm1258, %v1257, %v1252
        %v1260 = vadd.s32 %v1248, 4294967280
        %v1261 = vlaneseq
        %v1262 = vshrl.u32 %v1261, 7
        %v1263 = vsub.s32 %v1260, %v1262
        %v1264 = vrot.slane %v743, %v1263
        %vm1265 = vcmask 195712
        %v1266 = vsel %vm1265, %v1264, %v1259
        %v1267 = vadd.s32 %v1248, 4294967272
        %v1268 = vlaneseq
        %v1269 = vshrl.u32 %v1268, 7
        %v1270 = vsub.s32 %v1267, %v1269
        %v1271 = vrot.slane %v746, %v1270
        %vm1272 = vcmask 261312
        %v1273 = vsel %vm1272, %v1271, %v1266
        %v1274 = vadd.s32 %v1248, 4294967264
        %v1275 = vlaneseq
        %v1276 = vshrl.u32 %v1275, 7
        %v1277 = vsub.s32 %v1274, %v1276
        %v1278 = vrot.slane %v749, %v1277
        %vm1279 = vcmask 326912
        %v1280 = vsel %vm1279, %v1278, %v1273
        %v1281 = vadd.s32 %v1248, 4294967256
        %v1282 = vlaneseq
        %v1283 = vshrl.u32 %v1282, 7
        %v1284 = vsub.s32 %v1281, %v1283
        %v1285 = vrot.slane %v752, %v1284
        %vm1286 = vcmask 392512
        %v1287 = vsel %vm1286, %v1285, %v1280
        %v1288 = vadd.s32 %v1248, 4294967248
        %v1289 = vlaneseq
        %v1290 = vshrl.u32 %v1289, 7
        %v1291 = vsub.s32 %v1288, %v1290
        %v1292 = vrot.slane %v755, %v1291
        %vm1293 = vcmask 458112
        %v1294 = vsel %vm1293, %v1292, %v1287
        %v1295 = vadd.s32 %v1248, 4294967240
        %v1296 = vlaneseq
        %v1297 = vshrl.u32 %v1296, 7
        %v1298 = vsub.s32 %v1295, %v1297
        %v1299 = vrot.slane %v758, %v1298
        %vm1300 = vcmask 523712
        %v1301 = vsel %vm1300, %v1299, %v1294
        %v1302 = vadd.s32 %v1248, 4294967232
        %v1303 = vlaneseq
        %v1304 = vshrl.u32 %v1303, 7
        %v1305 = vsub.s32 %v1302, %v1304
        %v1306 = vrot.slane %v761, %v1305
        %vm1307 = vcmask 589312
        %v1308 = vsel %vm1307, %v1306, %v1301
        %v1309 = vadd.s32 %v1248, 4294967224
        %v1310 = vlaneseq
        %v1311 = vshrl.u32 %v1310, 7
        %v1312 = vsub.s32 %v1309, %v1311
        %v1313 = vrot.slane %v764, %v1312
        %vm1314 = vcmask 654912
        %v1315 = vsel %vm1314, %v1313, %v1308
        %v1316 = vadd.s32 %v1248, 4294967216
        %v1317 = vlaneseq
        %v1318 = vshrl.u32 %v1317, 7
        %v1319 = vsub.s32 %v1316, %v1318
        %v1320 = vrot.slane %v767, %v1319
        %vm1321 = vcmask 720512
        %v1322 = vsel %vm1321, %v1320, %v1315
        %v1323 = vadd.s32 %v1248, 4294967208
        %v1324 = vlaneseq
        %v1325 = vshrl.u32 %v1324, 7
        %v1326 = vsub.s32 %v1323, %v1325
        %v1327 = vrot.slane %v770, %v1326
        %vm1328 = vcmask 786112
        %v1329 = vsel %vm1328, %v1327, %v1322
        %v1330 = vadd.s32 %v1248, 4294967200
        %v1331 = vlaneseq
        %v1332 = vshrl.u32 %v1331, 7
        %v1333 = vsub.s32 %v1330, %v1332
        %v1334 = vrot.slane %v773, %v1333
        %vm1335 = vcmask 851712
        %v1336 = vsel %vm1335, %v1334, %v1329
        %v1337 = vadd.s32 %v1248, 4294967192
        %v1338 = vlaneseq
        %v1339 = vshrl.u32 %v1338, 7
        %v1340 = vsub.s32 %v1337, %v1339
        %v1341 = vrot.slane %v776, %v1340
        %vm1342 = vcmask 917312
        %v1343 = vsel %vm1342, %v1341, %v1336
        %v1344 = vadd.s32 %v1248, 4294967184
        %v1345 = vlaneseq
        %v1346 = vshrl.u32 %v1345, 7
        %v1347 = vsub.s32 %v1344, %v1346
        %v1348 = vrot.slane %v779, %v1347
        %vm1349 = vcmask 982912
        %v1350 = vsel %vm1349, %v1348, %v1343
        %v1351 = vadd.s32 %v1248, 4294967176
        %v1352 = vlaneseq
        %v1353 = vshrl.u32 %v1352, 7
        %v1354 = vsub.s32 %v1351, %v1353
        %v1355 = vrot.slane %v782, %v1354
        %vm1356 = vcmask 1048512
        %v1357 = vsel %vm1356, %v1355, %v1350
        %v1358 = vlaneseq
        %v1359 = vshrl.u32 %v1358, 7
        %v1360 = vsub.s32 %v1248, %v1359
        %v1361 = vrot.slane %v785, %v1360
        %v1362 = vlaneseq
        %v1363 = vshrl.u32 %v1362, 7
        %v1364 = vsub.s32 %v1253, %v1363
        %v1365 = vrot.slane %v788, %v1364
        %v1366 = vsel %vm1258, %v1365, %v1361
        %v1367 = vlaneseq
        %v1368 = vshrl.u32 %v1367, 7
        %v1369 = vsub.s32 %v1260, %v1368
        %v1370 = vrot.slane %v791, %v1369
        %v1371 = vsel %vm1265, %v1370, %v1366
        %v1372 = vlaneseq
        %v1373 = vshrl.u32 %v1372, 7
        %v1374 = vsub.s32 %v1267, %v1373
        %v1375 = vrot.slane %v794, %v1374
        %v1376 = vsel %vm1272, %v1375, %v1371
        %v1377 = vlaneseq
        %v1378 = vshrl.u32 %v1377, 7
        %v1379 = vsub.s32 %v1274, %v1378
        %v1380 = vrot.slane %v797, %v1379
        %v1381 = vsel %vm1279, %v1380, %v1376
        %v1382 = vlaneseq
        %v1383 = vshrl.u32 %v1382, 7
        %v1384 = vsub.s32 %v1281, %v1383
        %v1385 = vrot.slane %v800, %v1384
        %v1386 = vsel %vm1286, %v1385, %v1381
        %v1387 = vlaneseq
        %v1388 = vshrl.u32 %v1387, 7
        %v1389 = vsub.s32 %v1288, %v1388
        %v1390 = vrot.slane %v803, %v1389
        %v1391 = vsel %vm1293, %v1390, %v1386
        %v1392 = vlaneseq
        %v1393 = vshrl.u32 %v1392, 7
        %v1394 = vsub.s32 %v1295, %v1393
        %v1395 = vrot.slane %v806, %v1394
        %v1396 = vsel %vm1300, %v1395, %v1391
        %v1397 = vlaneseq
        %v1398 = vshrl.u32 %v1397, 7
        %v1399 = vsub.s32 %v1302, %v1398
        %v1400 = vrot.slane %v809, %v1399
        %v1401 = vsel %vm1307, %v1400, %v1396
        %v1402 = vlaneseq
        %v1403 = vshrl.u32 %v1402, 7
        %v1404 = vsub.s32 %v1309, %v1403
        %v1405 = vrot.slane %v812, %v1404
        %v1406 = vsel %vm1314, %v1405, %v1401
        %v1407 = vlaneseq
        %v1408 = vshrl.u32 %v1407, 7
        %v1409 = vsub.s32 %v1316, %v1408
        %v1410 = vrot.slane %v815, %v1409
        %v1411 = vsel %vm1321, %v1410, %v1406
        %v1412 = vlaneseq
        %v1413 = vshrl.u32 %v1412, 7
        %v1414 = vsub.s32 %v1323, %v1413
        %v1415 = vrot.slane %v818, %v1414
        %v1416 = vsel %vm1328, %v1415, %v1411
        %v1417 = vlaneseq
        %v1418 = vshrl.u32 %v1417, 7
        %v1419 = vsub.s32 %v1330, %v1418
        %v1420 = vrot.slane %v821, %v1419
        %v1421 = vsel %vm1335, %v1420, %v1416
        %v1422 = vlaneseq
        %v1423 = vshrl.u32 %v1422, 7
        %v1424 = vsub.s32 %v1337, %v1423
        %v1425 = vrot.slane %v824, %v1424
        %v1426 = vsel %vm1342, %v1425, %v1421
        %v1427 = vlaneseq
        %v1428 = vshrl.u32 %v1427, 7
        %v1429 = vsub.s32 %v1344, %v1428
        %v1430 = vrot.slane %v827, %v1429
        %v1431 = vsel %vm1349, %v1430, %v1426
        %v1432 = vlaneseq
        %v1433 = vshrl.u32 %v1432, 7
        %v1434 = vsub.s32 %v1351, %v1433
        %v1435 = vrot.slane %v830, %v1434
        %v1436 = vsel %vm1356, %v1435, %v1431
        %v1437 = vlaneseq
        %v1438 = vshrl.u32 %v1437, 7
        %v1439 = vsub.s32 %v1248, %v1438
        %v1440 = vrot.slane %v833, %v1439
        %v1441 = vlaneseq
        %v1442 = vshrl.u32 %v1441, 7
        %v1443 = vsub.s32 %v1253, %v1442
        %v1444 = vrot.slane %v836, %v1443
        %v1445 = vsel %vm1258, %v1444, %v1440
        %v1446 = vlaneseq
        %v1447 = vshrl.u32 %v1446, 7
        %v1448 = vsub.s32 %v1260, %v1447
        %v1449 = vrot.slane %v839, %v1448
        %v1450 = vsel %vm1265, %v1449, %v1445
        %v1451 = vlaneseq
        %v1452 = vshrl.u32 %v1451, 7
        %v1453 = vsub.s32 %v1267, %v1452
        %v1454 = vrot.slane %v842, %v1453
        %v1455 = vsel %vm1272, %v1454, %v1450
        %v1456 = vlaneseq
        %v1457 = vshrl.u32 %v1456, 7
        %v1458 = vsub.s32 %v1274, %v1457
        %v1459 = vrot.slane %v845, %v1458
        %v1460 = vsel %vm1279, %v1459, %v1455
        %v1461 = vlaneseq
        %v1462 = vshrl.u32 %v1461, 7
        %v1463 = vsub.s32 %v1281, %v1462
        %v1464 = vrot.slane %v848, %v1463
        %v1465 = vsel %vm1286, %v1464, %v1460
        %v1466 = vlaneseq
        %v1467 = vshrl.u32 %v1466, 7
        %v1468 = vsub.s32 %v1288, %v1467
        %v1469 = vrot.slane %v851, %v1468
        %v1470 = vsel %vm1293, %v1469, %v1465
        %v1471 = vlaneseq
        %v1472 = vshrl.u32 %v1471, 7
        %v1473 = vsub.s32 %v1295, %v1472
        %v1474 = vrot.slane %v854, %v1473
        %v1475 = vsel %vm1300, %v1474, %v1470
        %v1476 = vlaneseq
        %v1477 = vshrl.u32 %v1476, 7
        %v1478 = vsub.s32 %v1302, %v1477
        %v1479 = vrot.slane %v857, %v1478
        %v1480 = vsel %vm1307, %v1479, %v1475
        %v1481 = vlaneseq
        %v1482 = vshrl.u32 %v1481, 7
        %v1483 = vsub.s32 %v1309, %v1482
        %v1484 = vrot.slane %v860, %v1483
        %v1485 = vsel %vm1314, %v1484, %v1480
        %v1486 = vlaneseq
        %v1487 = vshrl.u32 %v1486, 7
        %v1488 = vsub.s32 %v1316, %v1487
        %v1489 = vrot.slane %v863, %v1488
        %v1490 = vsel %vm1321, %v1489, %v1485
        %v1491 = vlaneseq
        %v1492 = vshrl.u32 %v1491, 7
        %v1493 = vsub.s32 %v1323, %v1492
        %v1494 = vrot.slane %v866, %v1493
        %v1495 = vsel %vm1328, %v1494, %v1490
        %v1496 = vlaneseq
        %v1497 = vshrl.u32 %v1496, 7
        %v1498 = vsub.s32 %v1330, %v1497
        %v1499 = vrot.slane %v869, %v1498
        %v1500 = vsel %vm1335, %v1499, %v1495
        %v1501 = vlaneseq
        %v1502 = vshrl.u32 %v1501, 7
        %v1503 = vsub.s32 %v1337, %v1502
        %v1504 = vrot.slane %v872, %v1503
        %v1505 = vsel %vm1342, %v1504, %v1500
        %v1506 = vlaneseq
        %v1507 = vshrl.u32 %v1506, 7
        %v1508 = vsub.s32 %v1344, %v1507
        %v1509 = vrot.slane %v875, %v1508
        %v1510 = vsel %vm1349, %v1509, %v1505
        %v1511 = vlaneseq
        %v1512 = vshrl.u32 %v1511, 7
        %v1513 = vsub.s32 %v1351, %v1512
        %v1514 = vrot.slane %v878, %v1513
        %v1515 = vsel %vm1356, %v1514, %v1510
        %v1516 = vlaneseq
        %v1517 = vshrl.u32 %v1516, 7
        %v1518 = vsub.s32 %v1248, %v1517
        %v1519 = vrot.slane %v881, %v1518
        %v1520 = vlaneseq
        %v1521 = vshrl.u32 %v1520, 7
        %v1522 = vsub.s32 %v1253, %v1521
        %v1523 = vrot.slane %v884, %v1522
        %v1524 = vsel %vm1258, %v1523, %v1519
        %v1525 = vlaneseq
        %v1526 = vshrl.u32 %v1525, 7
        %v1527 = vsub.s32 %v1260, %v1526
        %v1528 = vrot.slane %v887, %v1527
        %v1529 = vsel %vm1265, %v1528, %v1524
        %v1530 = vlaneseq
        %v1531 = vshrl.u32 %v1530, 7
        %v1532 = vsub.s32 %v1267, %v1531
        %v1533 = vrot.slane %v890, %v1532
        %v1534 = vsel %vm1272, %v1533, %v1529
        %v1535 = vlaneseq
        %v1536 = vshrl.u32 %v1535, 7
        %v1537 = vsub.s32 %v1274, %v1536
        %v1538 = vrot.slane %v893, %v1537
        %v1539 = vsel %vm1279, %v1538, %v1534
        %v1540 = vlaneseq
        %v1541 = vshrl.u32 %v1540, 7
        %v1542 = vsub.s32 %v1281, %v1541
        %v1543 = vrot.slane %v896, %v1542
        %v1544 = vsel %vm1286, %v1543, %v1539
        %v1545 = vlaneseq
        %v1546 = vshrl.u32 %v1545, 7
        %v1547 = vsub.s32 %v1288, %v1546
        %v1548 = vrot.slane %v899, %v1547
        %v1549 = vsel %vm1293, %v1548, %v1544
        %v1550 = vlaneseq
        %v1551 = vshrl.u32 %v1550, 7
        %v1552 = vsub.s32 %v1295, %v1551
        %v1553 = vrot.slane %v902, %v1552
        %v1554 = vsel %vm1300, %v1553, %v1549
        %v1555 = vlaneseq
        %v1556 = vshrl.u32 %v1555, 7
        %v1557 = vsub.s32 %v1302, %v1556
        %v1558 = vrot.slane %v905, %v1557
        %v1559 = vsel %vm1307, %v1558, %v1554
        %v1560 = vlaneseq
        %v1561 = vshrl.u32 %v1560, 7
        %v1562 = vsub.s32 %v1309, %v1561
        %v1563 = vrot.slane %v908, %v1562
        %v1564 = vsel %vm1314, %v1563, %v1559
        %v1565 = vlaneseq
        %v1566 = vshrl.u32 %v1565, 7
        %v1567 = vsub.s32 %v1316, %v1566
        %v1568 = vrot.slane %v911, %v1567
        %v1569 = vsel %vm1321, %v1568, %v1564
        %v1570 = vlaneseq
        %v1571 = vshrl.u32 %v1570, 7
        %v1572 = vsub.s32 %v1323, %v1571
        %v1573 = vrot.slane %v914, %v1572
        %v1574 = vsel %vm1328, %v1573, %v1569
        %v1575 = vlaneseq
        %v1576 = vshrl.u32 %v1575, 7
        %v1577 = vsub.s32 %v1330, %v1576
        %v1578 = vrot.slane %v917, %v1577
        %v1579 = vsel %vm1335, %v1578, %v1574
        %v1580 = vlaneseq
        %v1581 = vshrl.u32 %v1580, 7
        %v1582 = vsub.s32 %v1337, %v1581
        %v1583 = vrot.slane %v920, %v1582
        %v1584 = vsel %vm1342, %v1583, %v1579
        %v1585 = vlaneseq
        %v1586 = vshrl.u32 %v1585, 7
        %v1587 = vsub.s32 %v1344, %v1586
        %v1588 = vrot.slane %v923, %v1587
        %v1589 = vsel %vm1349, %v1588, %v1584
        %v1590 = vlaneseq
        %v1591 = vshrl.u32 %v1590, 7
        %v1592 = vsub.s32 %v1351, %v1591
        %v1593 = vrot.slane %v926, %v1592
        %v1594 = vsel %vm1356, %v1593, %v1589
        %v1595 = vlaneseq
        %v1596 = vshrl.u32 %v1595, 7
        %v1597 = vsub.s32 %v1248, %v1596
        %v1598 = vrot.slane %v929, %v1597
        %v1599 = vlaneseq
        %v1600 = vshrl.u32 %v1599, 7
        %v1601 = vsub.s32 %v1253, %v1600
        %v1602 = vrot.slane %v932, %v1601
        %v1603 = vsel %vm1258, %v1602, %v1598
        %v1604 = vlaneseq
        %v1605 = vshrl.u32 %v1604, 7
        %v1606 = vsub.s32 %v1260, %v1605
        %v1607 = vrot.slane %v935, %v1606
        %v1608 = vsel %vm1265, %v1607, %v1603
        %v1609 = vlaneseq
        %v1610 = vshrl.u32 %v1609, 7
        %v1611 = vsub.s32 %v1267, %v1610
        %v1612 = vrot.slane %v938, %v1611
        %v1613 = vsel %vm1272, %v1612, %v1608
        %v1614 = vlaneseq
        %v1615 = vshrl.u32 %v1614, 7
        %v1616 = vsub.s32 %v1274, %v1615
        %v1617 = vrot.slane %v941, %v1616
        %v1618 = vsel %vm1279, %v1617, %v1613
        %v1619 = vlaneseq
        %v1620 = vshrl.u32 %v1619, 7
        %v1621 = vsub.s32 %v1281, %v1620
        %v1622 = vrot.slane %v944, %v1621
        %v1623 = vsel %vm1286, %v1622, %v1618
        %v1624 = vlaneseq
        %v1625 = vshrl.u32 %v1624, 7
        %v1626 = vsub.s32 %v1288, %v1625
        %v1627 = vrot.slane %v947, %v1626
        %v1628 = vsel %vm1293, %v1627, %v1623
        %v1629 = vlaneseq
        %v1630 = vshrl.u32 %v1629, 7
        %v1631 = vsub.s32 %v1295, %v1630
        %v1632 = vrot.slane %v950, %v1631
        %v1633 = vsel %vm1300, %v1632, %v1628
        %v1634 = vlaneseq
        %v1635 = vshrl.u32 %v1634, 7
        %v1636 = vsub.s32 %v1302, %v1635
        %v1637 = vrot.slane %v953, %v1636
        %v1638 = vsel %vm1307, %v1637, %v1633
        %v1639 = vlaneseq
        %v1640 = vshrl.u32 %v1639, 7
        %v1641 = vsub.s32 %v1309, %v1640
        %v1642 = vrot.slane %v956, %v1641
        %v1643 = vsel %vm1314, %v1642, %v1638
        %v1644 = vlaneseq
        %v1645 = vshrl.u32 %v1644, 7
        %v1646 = vsub.s32 %v1316, %v1645
        %v1647 = vrot.slane %v959, %v1646
        %v1648 = vsel %vm1321, %v1647, %v1643
        %v1649 = vlaneseq
        %v1650 = vshrl.u32 %v1649, 7
        %v1651 = vsub.s32 %v1323, %v1650
        %v1652 = vrot.slane %v962, %v1651
        %v1653 = vsel %vm1328, %v1652, %v1648
        %v1654 = vlaneseq
        %v1655 = vshrl.u32 %v1654, 7
        %v1656 = vsub.s32 %v1330, %v1655
        %v1657 = vrot.slane %v965, %v1656
        %v1658 = vsel %vm1335, %v1657, %v1653
        %v1659 = vlaneseq
        %v1660 = vshrl.u32 %v1659, 7
        %v1661 = vsub.s32 %v1337, %v1660
        %v1662 = vrot.slane %v968, %v1661
        %v1663 = vsel %vm1342, %v1662, %v1658
        %v1664 = vlaneseq
        %v1665 = vshrl.u32 %v1664, 7
        %v1666 = vsub.s32 %v1344, %v1665
        %v1667 = vrot.slane %v971, %v1666
        %v1668 = vsel %vm1349, %v1667, %v1663
        %v1669 = vlaneseq
        %v1670 = vshrl.u32 %v1669, 7
        %v1671 = vsub.s32 %v1351, %v1670
        %v1672 = vrot.slane %v974, %v1671
        %v1673 = vsel %vm1356, %v1672, %v1668
        %v1674 = vlaneseq
        %v1675 = vshrl.u32 %v1674, 7
        %v1676 = vsub.s32 %v1248, %v1675
        %v1677 = vrot.slane %v977, %v1676
        %v1678 = vlaneseq
        %v1679 = vshrl.u32 %v1678, 7
        %v1680 = vsub.s32 %v1253, %v1679
        %v1681 = vrot.slane %v980, %v1680
        %v1682 = vsel %vm1258, %v1681, %v1677
        %v1683 = vlaneseq
        %v1684 = vshrl.u32 %v1683, 7
        %v1685 = vsub.s32 %v1260, %v1684
        %v1686 = vrot.slane %v983, %v1685
        %v1687 = vsel %vm1265, %v1686, %v1682
        %v1688 = vlaneseq
        %v1689 = vshrl.u32 %v1688, 7
        %v1690 = vsub.s32 %v1267, %v1689
        %v1691 = vrot.slane %v986, %v1690
        %v1692 = vsel %vm1272, %v1691, %v1687
        %v1693 = vlaneseq
        %v1694 = vshrl.u32 %v1693, 7
        %v1695 = vsub.s32 %v1274, %v1694
        %v1696 = vrot.slane %v989, %v1695
        %v1697 = vsel %vm1279, %v1696, %v1692
        %v1698 = vlaneseq
        %v1699 = vshrl.u32 %v1698, 7
        %v1700 = vsub.s32 %v1281, %v1699
        %v1701 = vrot.slane %v992, %v1700
        %v1702 = vsel %vm1286, %v1701, %v1697
        %v1703 = vlaneseq
        %v1704 = vshrl.u32 %v1703, 7
        %v1705 = vsub.s32 %v1288, %v1704
        %v1706 = vrot.slane %v995, %v1705
        %v1707 = vsel %vm1293, %v1706, %v1702
        %v1708 = vlaneseq
        %v1709 = vshrl.u32 %v1708, 7
        %v1710 = vsub.s32 %v1295, %v1709
        %v1711 = vrot.slane %v998, %v1710
        %v1712 = vsel %vm1300, %v1711, %v1707
        %v1713 = vlaneseq
        %v1714 = vshrl.u32 %v1713, 7
        %v1715 = vsub.s32 %v1302, %v1714
        %v1716 = vrot.slane %v1001, %v1715
        %v1717 = vsel %vm1307, %v1716, %v1712
        %v1718 = vlaneseq
        %v1719 = vshrl.u32 %v1718, 7
        %v1720 = vsub.s32 %v1309, %v1719
        %v1721 = vrot.slane %v1004, %v1720
        %v1722 = vsel %vm1314, %v1721, %v1717
        %v1723 = vlaneseq
        %v1724 = vshrl.u32 %v1723, 7
        %v1725 = vsub.s32 %v1316, %v1724
        %v1726 = vrot.slane %v1007, %v1725
        %v1727 = vsel %vm1321, %v1726, %v1722
        %v1728 = vlaneseq
        %v1729 = vshrl.u32 %v1728, 7
        %v1730 = vsub.s32 %v1323, %v1729
        %v1731 = vrot.slane %v1010, %v1730
        %v1732 = vsel %vm1328, %v1731, %v1727
        %v1733 = vlaneseq
        %v1734 = vshrl.u32 %v1733, 7
        %v1735 = vsub.s32 %v1330, %v1734
        %v1736 = vrot.slane %v1013, %v1735
        %v1737 = vsel %vm1335, %v1736, %v1732
        %v1738 = vlaneseq
        %v1739 = vshrl.u32 %v1738, 7
        %v1740 = vsub.s32 %v1337, %v1739
        %v1741 = vrot.slane %v1016, %v1740
        %v1742 = vsel %vm1342, %v1741, %v1737
        %v1743 = vlaneseq
        %v1744 = vshrl.u32 %v1743, 7
        %v1745 = vsub.s32 %v1344, %v1744
        %v1746 = vrot.slane %v1019, %v1745
        %v1747 = vsel %vm1349, %v1746, %v1742
        %v1748 = vlaneseq
        %v1749 = vshrl.u32 %v1748, 7
        %v1750 = vsub.s32 %v1351, %v1749
        %v1751 = vrot.slane %v1022, %v1750
        %v1752 = vsel %vm1356, %v1751, %v1747
        %v1753 = vlaneseq
        %v1754 = vshrl.u32 %v1753, 7
        %v1755 = vsub.s32 %v1248, %v1754
        %v1756 = vrot.slane %v1025, %v1755
        %v1757 = vlaneseq
        %v1758 = vshrl.u32 %v1757, 7
        %v1759 = vsub.s32 %v1253, %v1758
        %v1760 = vrot.slane %v1028, %v1759
        %v1761 = vsel %vm1258, %v1760, %v1756
        %v1762 = vlaneseq
        %v1763 = vshrl.u32 %v1762, 7
        %v1764 = vsub.s32 %v1260, %v1763
        %v1765 = vrot.slane %v1031, %v1764
        %v1766 = vsel %vm1265, %v1765, %v1761
        %v1767 = vlaneseq
        %v1768 = vshrl.u32 %v1767, 7
        %v1769 = vsub.s32 %v1267, %v1768
        %v1770 = vrot.slane %v1034, %v1769
        %v1771 = vsel %vm1272, %v1770, %v1766
        %v1772 = vlaneseq
        %v1773 = vshrl.u32 %v1772, 7
        %v1774 = vsub.s32 %v1274, %v1773
        %v1775 = vrot.slane %v1037, %v1774
        %v1776 = vsel %vm1279, %v1775, %v1771
        %v1777 = vlaneseq
        %v1778 = vshrl.u32 %v1777, 7
        %v1779 = vsub.s32 %v1281, %v1778
        %v1780 = vrot.slane %v1040, %v1779
        %v1781 = vsel %vm1286, %v1780, %v1776
        %v1782 = vlaneseq
        %v1783 = vshrl.u32 %v1782, 7
        %v1784 = vsub.s32 %v1288, %v1783
        %v1785 = vrot.slane %v1043, %v1784
        %v1786 = vsel %vm1293, %v1785, %v1781
        %v1787 = vlaneseq
        %v1788 = vshrl.u32 %v1787, 7
        %v1789 = vsub.s32 %v1295, %v1788
        %v1790 = vrot.slane %v1046, %v1789
        %v1791 = vsel %vm1300, %v1790, %v1786
        %v1792 = vlaneseq
        %v1793 = vshrl.u32 %v1792, 7
        %v1794 = vsub.s32 %v1302, %v1793
        %v1795 = vrot.slane %v1049, %v1794
        %v1796 = vsel %vm1307, %v1795, %v1791
        %v1797 = vlaneseq
        %v1798 = vshrl.u32 %v1797, 7
        %v1799 = vsub.s32 %v1309, %v1798
        %v1800 = vrot.slane %v1052, %v1799
        %v1801 = vsel %vm1314, %v1800, %v1796
        %v1802 = vlaneseq
        %v1803 = vshrl.u32 %v1802, 7
        %v1804 = vsub.s32 %v1316, %v1803
        %v1805 = vrot.slane %v1055, %v1804
        %v1806 = vsel %vm1321, %v1805, %v1801
        %v1807 = vlaneseq
        %v1808 = vshrl.u32 %v1807, 7
        %v1809 = vsub.s32 %v1323, %v1808
        %v1810 = vrot.slane %v1058, %v1809
        %v1811 = vsel %vm1328, %v1810, %v1806
        %v1812 = vlaneseq
        %v1813 = vshrl.u32 %v1812, 7
        %v1814 = vsub.s32 %v1330, %v1813
        %v1815 = vrot.slane %v1061, %v1814
        %v1816 = vsel %vm1335, %v1815, %v1811
        %v1817 = vlaneseq
        %v1818 = vshrl.u32 %v1817, 7
        %v1819 = vsub.s32 %v1337, %v1818
        %v1820 = vrot.slane %v1064, %v1819
        %v1821 = vsel %vm1342, %v1820, %v1816
        %v1822 = vlaneseq
        %v1823 = vshrl.u32 %v1822, 7
        %v1824 = vsub.s32 %v1344, %v1823
        %v1825 = vrot.slane %v1067, %v1824
        %v1826 = vsel %vm1349, %v1825, %v1821
        %v1827 = vlaneseq
        %v1828 = vshrl.u32 %v1827, 7
        %v1829 = vsub.s32 %v1351, %v1828
        %v1830 = vrot.slane %v1070, %v1829
        %v1831 = vsel %vm1356, %v1830, %v1826
        %v1832 = vlaneseq
        %v1833 = vshrl.u32 %v1832, 7
        %v1834 = vsub.s32 %v1248, %v1833
        %v1835 = vrot.slane %v1073, %v1834
        %v1836 = vlaneseq
        %v1837 = vshrl.u32 %v1836, 7
        %v1838 = vsub.s32 %v1253, %v1837
        %v1839 = vrot.slane %v1076, %v1838
        %v1840 = vsel %vm1258, %v1839, %v1835
        %v1841 = vlaneseq
        %v1842 = vshrl.u32 %v1841, 7
        %v1843 = vsub.s32 %v1260, %v1842
        %v1844 = vrot.slane %v1079, %v1843
        %v1845 = vsel %vm1265, %v1844, %v1840
        %v1846 = vlaneseq
        %v1847 = vshrl.u32 %v1846, 7
        %v1848 = vsub.s32 %v1267, %v1847
        %v1849 = vrot.slane %v1082, %v1848
        %v1850 = vsel %vm1272, %v1849, %v1845
        %v1851 = vlaneseq
        %v1852 = vshrl.u32 %v1851, 7
        %v1853 = vsub.s32 %v1274, %v1852
        %v1854 = vrot.slane %v1085, %v1853
        %v1855 = vsel %vm1279, %v1854, %v1850
        %v1856 = vlaneseq
        %v1857 = vshrl.u32 %v1856, 7
        %v1858 = vsub.s32 %v1281, %v1857
        %v1859 = vrot.slane %v1088, %v1858
        %v1860 = vsel %vm1286, %v1859, %v1855
        %v1861 = vlaneseq
        %v1862 = vshrl.u32 %v1861, 7
        %v1863 = vsub.s32 %v1288, %v1862
        %v1864 = vrot.slane %v1091, %v1863
        %v1865 = vsel %vm1293, %v1864, %v1860
        %v1866 = vlaneseq
        %v1867 = vshrl.u32 %v1866, 7
        %v1868 = vsub.s32 %v1295, %v1867
        %v1869 = vrot.slane %v1094, %v1868
        %v1870 = vsel %vm1300, %v1869, %v1865
        %v1871 = vlaneseq
        %v1872 = vshrl.u32 %v1871, 7
        %v1873 = vsub.s32 %v1302, %v1872
        %v1874 = vrot.slane %v1097, %v1873
        %v1875 = vsel %vm1307, %v1874, %v1870
        %v1876 = vlaneseq
        %v1877 = vshrl.u32 %v1876, 7
        %v1878 = vsub.s32 %v1309, %v1877
        %v1879 = vrot.slane %v1100, %v1878
        %v1880 = vsel %vm1314, %v1879, %v1875
        %v1881 = vlaneseq
        %v1882 = vshrl.u32 %v1881, 7
        %v1883 = vsub.s32 %v1316, %v1882
        %v1884 = vrot.slane %v1103, %v1883
        %v1885 = vsel %vm1321, %v1884, %v1880
        %v1886 = vlaneseq
        %v1887 = vshrl.u32 %v1886, 7
        %v1888 = vsub.s32 %v1323, %v1887
        %v1889 = vrot.slane %v1106, %v1888
        %v1890 = vsel %vm1328, %v1889, %v1885
        %v1891 = vlaneseq
        %v1892 = vshrl.u32 %v1891, 7
        %v1893 = vsub.s32 %v1330, %v1892
        %v1894 = vrot.slane %v1109, %v1893
        %v1895 = vsel %vm1335, %v1894, %v1890
        %v1896 = vlaneseq
        %v1897 = vshrl.u32 %v1896, 7
        %v1898 = vsub.s32 %v1337, %v1897
        %v1899 = vrot.slane %v1112, %v1898
        %v1900 = vsel %vm1342, %v1899, %v1895
        %v1901 = vlaneseq
        %v1902 = vshrl.u32 %v1901, 7
        %v1903 = vsub.s32 %v1344, %v1902
        %v1904 = vrot.slane %v1115, %v1903
        %v1905 = vsel %vm1349, %v1904, %v1900
        %v1906 = vlaneseq
        %v1907 = vshrl.u32 %v1906, 7
        %v1908 = vsub.s32 %v1351, %v1907
        %v1909 = vrot.slane %v1118, %v1908
        %v1910 = vsel %vm1356, %v1909, %v1905
        %vm1911 = vcmask 1041409
        %v1912 = vsel %vm1911, %v1436, %v1357
        %vm1913 = vcmask 1042434
        %v1914 = vsel %vm1913, %v1515, %v1912
        %vm1915 = vcmask 1043459
        %v1916 = vsel %vm1915, %v1594, %v1914
        %vm1917 = vcmask 1044484
        %v1918 = vsel %vm1917, %v1673, %v1916
        %vm1919 = vcmask 1045509
        %v1920 = vsel %vm1919, %v1752, %v1918
        %vm1921 = vcmask 1046534
        %v1922 = vsel %vm1921, %v1831, %v1920
        %vm1923 = vcmask 1047559
        %v1924 = vsel %vm1923, %v1910, %v1922
        %1926 = vst [vmem:[%s218] sm:$0xff] %v1924
        %s1927 = sand.u32 %s125, 1
        %s1928 = scalar_lea.sflag [#allocation3], %s1927
        %s1929 = sand.u32 %s125, 1
        %s1930 = smul.addr %s1929, 8
        %s1931 = scalar_lea.vmem [#allocation2], %s1930
        // Predicated region
        $region33: #{tpu_custom_call.1} parent=31 // pred_check
          %p1932 = pneg %p135
        $region34: #{tpu_custom_call.1} parent=31 // pred_check_branch
          %1934 = sbr.rel (%p1932) target = $region36
        $region35: #{tpu_custom_call.1} parent=31 // pred_region
          %s1936 = ssub.s32 128, 128
          %1937 = vsyncadd %s1928, %s1936
          %s1938 = sadd.s32 %s24, %s23
          %s1939 = sadd.s32 %s1938, %s22
          %s1940 = smul.addr %s1939, 128
          %s1941 = scalar_lea.hbm %s3, %s1940
          %s1943 = sshll.u32 %s1931, 4
          %s1944 = int_to_ptr.vmem [resolvable:$true] %s1943
          %1946 = dma.vmem_to_hbm [thread:$0]  %s1944, 128, %s1941, %s1928
        $region36: #{tpu_custom_call.1} parent=31 // pred_fallthru
          _
      $region32: #{tpu_custom_call.1} parent=5 // pred_fallthru
        _
      %p1947 = scmp.le.s32.totalorder 2, %s12
      // Predicated region
      $region37: #{tpu_custom_call.1} parent=5 // pred_check
        %p1948 = pneg %p1947
      $region38: #{tpu_custom_call.1} parent=5 // pred_check_branch
        %1950 = sbr.rel (%p1948) target = $region40
      $region39: #{tpu_custom_call.1} parent=5 // pred_region
        %s1951 = ssub.s32 %s12, 2
        // Predicated region
        $region41: #{tpu_custom_call.1} parent=39 // pred_check
          %p1952 = pneg %p141
        $region42: #{tpu_custom_call.1} parent=39 // pred_check_branch
          %1954 = sbr.rel (%p1952) target = $region44
        $region43: #{tpu_custom_call.1} parent=39 // pred_region
          %s1955 = sand.u32 %s126, 1
          %s1956 = scalar_lea.sflag [#allocation3], %s1955
          %s1957 = sand.u32 %s126, 1
          %s1958 = smul.addr %s1957, 8
          %s1959 = scalar_lea.vmem [#allocation2], %s1958
          %1960 = dma.done %s1956, 128
        $region44: #{tpu_custom_call.1} parent=39 // pred_fallthru
          _
      $region40: #{tpu_custom_call.1} parent=5 // pred_fallthru
        _
    $region6: #{tpu_custom_call.1} parent=1 // loop_footer
      %s16 = sadd.s32 1, %s12
    $region7: #{tpu_custom_call.1} parent=1 // loop_footer_branch
      %11 = sbr.rel target = $region3
    $region8: #{tpu_custom_call.1} parent=1 // loop_exit
      _
    %1961 = vsyncpa [#allocation3], 1
    %s1962 = scalar_lea.sflag [#allocation3], 1
    %1963 = vsyncpa %s1962, 1

</llo_original>
